<compile_context>
chip_gen: v6e
topology: v6e:2x2x1
jax: 0.10.0
libtpu: 0.0.40
codegen_flags: <defaults>
</compile_context>

<pallas_src>
import jax
import jax.numpy as jnp
from jax.experimental import pallas as pl
from jax.experimental.pallas import tpu as pltpu


# ----------------------------------------------------------------------------
# Fused kernel: bidirectional GRU + concat + attention pooling
# ----------------------------------------------------------------------------
def _sent2vec_kernel(x_ref, wih_ref, bih_ref, whh_ref, bhh_ref,
                     wu_ref, bu_ref, wctx_ref, out_ref):
    T, B, E = x_ref.shape
    H2 = whh_ref.shape[0]          # 2H
    H = H2 // 2
    H3 = 3 * H
    H6 = 6 * H

    # ---- Hoisted input projections: one well-shaped GEMM -------------------
    # columns [0:3H] = forward gates (r,z,n), [3H:6H] = backward gates.
    x_flat = x_ref[...].reshape(T * B, E)
    gi_all = (jnp.dot(x_flat, wih_ref[...], preferred_element_type=jnp.float32)
              + bih_ref[...]).reshape(T, B, H6)

    whh = whh_ref[...]                                  # (2H, 6H) block-diag
    bhh = jnp.broadcast_to(bhh_ref[...], (B, H6))       # hoisted broadcast

    hf = jnp.zeros((B, H), jnp.float32)
    hb = jnp.zeros((B, H), jnp.float32)
    hf_seq = []
    hb_seq = []

    # ---- Fused fwd/bwd recurrence, fully unrolled over static T ------------
    for t in range(T):
        h_cat = jnp.concatenate([hf, hb], axis=1)        # (B, 2H)
        # one recurrent MXU call per step for both directions
        gh = jnp.dot(h_cat, whh, preferred_element_type=jnp.float32) + bhh
        ghf, ghb = gh[:, :H3], gh[:, H3:]
        gif = gi_all[t, :, :H3]                          # forward consumes x[t]
        gib = gi_all[T - 1 - t, :, H3:]                  # backward consumes x[T-1-t]

        # PyTorch GRU cell:
        #   r = sigmoid(gi_r + gh_r); z = sigmoid(gi_z + gh_z)
        #   n = tanh(gi_n + r * gh_n);  h' = (1 - z) * n + z * h
        rf = jax.nn.sigmoid(gif[:, :H] + ghf[:, :H])
        zf = jax.nn.sigmoid(gif[:, H:2 * H] + ghf[:, H:2 * H])
        nf = jnp.tanh(gif[:, 2 * H:] + rf * ghf[:, 2 * H:])
        hf = (1.0 - zf) * nf + zf * hf

        rb = jax.nn.sigmoid(gib[:, :H] + ghb[:, :H])
        zb = jax.nn.sigmoid(gib[:, H:2 * H] + ghb[:, H:2 * H])
        nb = jnp.tanh(gib[:, 2 * H:] + rb * ghb[:, 2 * H:])
        hb = (1.0 - zb) * nb + zb * hb

        hf_seq.append(hf)
        hb_seq.append(hb)

    # sent_encoded[t] = [h_fwd(t) | h_bwd(t)]; the backward hidden for output
    # position t was produced at loop step T-1-t.
    enc = jnp.stack(
        [jnp.concatenate([hf_seq[t], hb_seq[T - 1 - t]], axis=1)
         for t in range(T)], axis=0)                     # (T, B, 2H)

    # ---- Attention pooling (PyTorch AttentionLayer semantics) --------------
    u = jnp.tanh(
        jnp.dot(enc.reshape(T * B, H2), wu_ref[...],
                preferred_element_type=jnp.float32) + bu_ref[...])
    # context projection as a VPU multiply-reduce (avoids a 1-lane MXU output)
    alpha = jnp.sum(u.reshape(T, B, H2) * wctx_ref[...], axis=-1)   # (T, B)
    # softmax over axis=1: the batch axis — matches the PyTorch module, which
    # treats x.size(0)=T as its "batch" dimension.
    m = jnp.max(alpha, axis=1, keepdims=True)
    e = jnp.exp(alpha - m)
    w = e / jnp.sum(e, axis=1, keepdims=True)                       # (T, B)
    out_ref[...] = jnp.sum(w[:, :, None] * enc, axis=1)             # (T, 2H)


# ----------------------------------------------------------------------------
# Wrapper: fuse per-direction weights once, then a single pallas_call
# ----------------------------------------------------------------------------
def fuse_params(params):
    """Build the fused weight layouts consumed by the kernel (done once)."""
    H = params["whh_f"].shape[0]
    z = jnp.zeros((H, 3 * H), jnp.float32)
    whh_cat = jnp.concatenate(
        [jnp.concatenate([params["whh_f"], z], axis=1),
         jnp.concatenate([z, params["whh_b"]], axis=1)], axis=0)    # (2H, 6H)
    return {
        "wih": jnp.concatenate([params["wih_f"], params["wih_b"]], axis=1),
        "bih": jnp.concatenate([params["bih_f"], params["bih_b"]], axis=1),
        "whh": whh_cat,
        "bhh": jnp.concatenate([params["bhh_f"], params["bhh_b"]], axis=1),
        "wu": params["wu"],
        "bu": params["bu"],
        "wctx_row": params["wctx"].T,                               # (1, 2H)
    }


@jax.jit
def sent2vec_forward(sent_embeded, fused):
    T, B, E = sent_embeded.shape
    H2 = fused["whh"].shape[0]
    vmem = pl.BlockSpec(memory_space=pltpu.MemorySpace.VMEM)
    return pl.pallas_call(
        _sent2vec_kernel,
        out_shape=jax.ShapeDtypeStruct((T, H2), jnp.float32),
        in_specs=[vmem] * 8,
        out_specs=vmem,
    )(sent_embeded, fused["wih"], fused["bih"], fused["whh"], fused["bhh"],
      fused["wu"], fused["bu"], fused["wctx_row"])


# ----------------------------------------------------------------------------
# Parameter init (PyTorch-style uniform(-1/sqrt(fan), 1/sqrt(fan)))
# ----------------------------------------------------------------------------
def init_params(key, embedding_size, hidden_size):
    H, E = hidden_size, embedding_size
    k = 1.0 / jnp.sqrt(jnp.float32(H))
    k2 = 1.0 / jnp.sqrt(jnp.float32(2 * H))
    keys = jax.random.split(key, 12)
    u = lambda kk, shape, kk_: jax.random.uniform(kk, shape, jnp.float32, -kk_, kk_)
    return {
        # GRU weights, stored transposed (kernel does x @ W); gate order r,z,n.
        "wih_f": u(keys[0], (E, 3 * H), k),
        "whh_f": u(keys[1], (H, 3 * H), k),
        "bih_f": u(keys[2], (1, 3 * H), k),
        "bhh_f": u(keys[3], (1, 3 * H), k),
        "wih_b": u(keys[4], (E, 3 * H), k),
        "whh_b": u(keys[5], (H, 3 * H), k),
        "bih_b": u(keys[6], (1, 3 * H), k),
        "bhh_b": u(keys[7], (1, 3 * H), k),
        # Attention: u = Linear(2H, 2H), u_context = Linear(2H, 1, bias=False)
        "wu": u(keys[8], (2 * H, 2 * H), k2),
        "bu": u(keys[9], (1, 2 * H), k2),
        "wctx": u(keys[10], (2 * H, 1), k2),
    }


# ----------------------------------------------------------------------------
# Pure-JAX reference (same math, full-precision matmuls) for a sanity check
# ----------------------------------------------------------------------------
def sent2vec_reference(x, params):
    T, B, E = x.shape
    H = params["whh_f"].shape[0]
    hi = jax.lax.Precision.HIGHEST

    def cell(h, x_t, wih, whh, bih, bhh):
        gi = jnp.dot(x_t, wih, precision=hi) + bih
        gh = jnp.dot(h, whh, precision=hi) + bhh
        r = jax.nn.sigmoid(gi[:, :H] + gh[:, :H])
        z = jax.nn.sigmoid(gi[:, H:2 * H] + gh[:, H:2 * H])
        n = jnp.tanh(gi[:, 2 * H:] + r * gh[:, 2 * H:])
        return (1 - z) * n + z * h

    hf = jnp.zeros((B, H), jnp.float32)
    hb = jnp.zeros((B, H), jnp.float32)
    outs_f, outs_b = [], []
    for t in range(T):
        hf = cell(hf, x[t], params["wih_f"], params["whh_f"],
                  params["bih_f"], params["bhh_f"])
        outs_f.append(hf)
    for t in range(T - 1, -1, -1):
        hb = cell(hb, x[t], params["wih_b"], params["whh_b"],
                  params["bih_b"], params["bhh_b"])
        outs_b.append(hb)
    outs_b = outs_b[::-1]
    enc = jnp.concatenate([jnp.stack(outs_f), jnp.stack(outs_b)], axis=-1)
    u = jnp.tanh(jnp.dot(enc.reshape(T * B, 2 * H), params["wu"], precision=hi)
                 + params["bu"])
    alpha = jnp.dot(u, params["wctx"], precision=hi).reshape(T, B)
    alpha = jax.nn.softmax(alpha, axis=1)
    return jnp.sum(alpha[:, :, None] * enc, axis=1)


if __name__ == "__main__":
    T, B, E, H = 8, 2, 32, 32   # seq_len, batch, embedding_size, hidden_size
    key = jax.random.PRNGKey(0)
    k_x, k_p = jax.random.split(key)
    sent_embeded = jax.random.normal(k_x, (T, B, E), jnp.float32)
    params = init_params(k_p, E, H)
    fused = fuse_params(params)

    out = sent2vec_forward(sent_embeded, fused)
    out = jax.block_until_ready(out)

    ref = sent2vec_reference(sent_embeded, params)
    assert out.shape == (T, 2 * H), out.shape
    err = float(jnp.max(jnp.abs(out - ref)))
    assert err < 2e-3, f"max abs err {err}"
    print("KERNEL_OK")
</pallas_src>

<mosaic_0001>
module attributes {stable_mosaic.version = 11 : i64} {
  func.func @_sent2vec_kernel(%arg0: memref<8x2x32xf32, #tpu.memory_space<vmem>>, %arg1: memref<32x192xf32, #tpu.memory_space<vmem>>, %arg2: memref<1x192xf32, #tpu.memory_space<vmem>>, %arg3: memref<64x192xf32, #tpu.memory_space<vmem>>, %arg4: memref<1x192xf32, #tpu.memory_space<vmem>>, %arg5: memref<64x64xf32, #tpu.memory_space<vmem>>, %arg6: memref<1x64xf32, #tpu.memory_space<vmem>>, %arg7: memref<1x64xf32, #tpu.memory_space<vmem>>, %arg8: memref<8x64xf32, #tpu.memory_space<vmem>>) attributes {dimension_semantics = [], scalar_prefetch = 0 : i64, scratch_operands = 0 : i64, tpu.core_type = #tpu.core_type<tc>} {
    %c0 = arith.constant 0 : index
    %c0_0 = arith.constant 0 : index
    %c0_1 = arith.constant 0 : index
    %0 = vector.load %arg0[%c0, %c0_0, %c0_1] : memref<8x2x32xf32, #tpu.memory_space<vmem>>, vector<8x2x32xf32>
    %1 = vector.shape_cast %0 : vector<8x2x32xf32> to vector<16x32xf32>
    %c0_2 = arith.constant 0 : index
    %c0_3 = arith.constant 0 : index
    %2 = vector.load %arg1[%c0_2, %c0_3] : memref<32x192xf32, #tpu.memory_space<vmem>>, vector<32x192xf32>
    %cst = arith.constant dense<0.000000e+00> : vector<16x192xf32>
    %3 = tpu.matmul %1, %2, %cst {dimension_numbers = #tpu.dot_dimension_numbers<[1], [0], [0], [1], [0, 0, 1, 1], [], []>} : vector<16x32xf32>, vector<32x192xf32>, vector<16x192xf32> -> vector<16x192xf32>
    %c0_4 = arith.constant 0 : index
    %c0_5 = arith.constant 0 : index
    %4 = vector.load %arg2[%c0_4, %c0_5] : memref<1x192xf32, #tpu.memory_space<vmem>>, vector<1x192xf32>
    %5 = vector.broadcast %4 : vector<1x192xf32> to vector<16x192xf32>
    %6 = arith.addf %3, %5 : vector<16x192xf32>
    %7 = vector.shape_cast %6 : vector<16x192xf32> to vector<8x2x192xf32>
    %c0_6 = arith.constant 0 : index
    %c0_7 = arith.constant 0 : index
    %8 = vector.load %arg3[%c0_6, %c0_7] : memref<64x192xf32, #tpu.memory_space<vmem>>, vector<64x192xf32>
    %c0_8 = arith.constant 0 : index
    %c0_9 = arith.constant 0 : index
    %9 = vector.load %arg4[%c0_8, %c0_9] : memref<1x192xf32, #tpu.memory_space<vmem>>, vector<1x192xf32>
    %10 = vector.shape_cast %9 : vector<1x192xf32> to vector<1x192xf32>
    %11 = vector.broadcast %10 : vector<1x192xf32> to vector<2x192xf32>
    %cst_10 = arith.constant 0.000000e+00 : f32
    %12 = vector.broadcast %cst_10 : f32 to vector<2x32xf32>
    %cst_11 = arith.constant 0.000000e+00 : f32
    %13 = vector.broadcast %cst_11 : f32 to vector<2x32xf32>
    %14 = tpu.concatenate %12, %13 in 1 : vector<2x32xf32>, vector<2x32xf32> -> vector<2x64xf32>
    %cst_12 = arith.constant dense<0.000000e+00> : vector<2x192xf32>
    %15 = tpu.matmul %14, %8, %cst_12 {dimension_numbers = #tpu.dot_dimension_numbers<[1], [0], [0], [1], [0, 0, 1, 1], [], []>} : vector<2x64xf32>, vector<64x192xf32>, vector<2x192xf32> -> vector<2x192xf32>
    %16 = arith.addf %15, %11 : vector<2x192xf32>
    %17 = vector.extract_strided_slice %16 {offsets = [0, 0], sizes = [2, 96], strides = [1, 1]} : vector<2x192xf32> to vector<2x96xf32>
    %18 = vector.extract_strided_slice %16 {offsets = [0, 96], sizes = [2, 96], strides = [1, 1]} : vector<2x192xf32> to vector<2x96xf32>
    %19 = vector.extract_strided_slice %7 {offsets = [0, 0, 0], sizes = [1, 2, 96], strides = [1, 1, 1]} : vector<8x2x192xf32> to vector<1x2x96xf32>
    %20 = vector.shape_cast %19 : vector<1x2x96xf32> to vector<2x96xf32>
    %21 = vector.extract_strided_slice %7 {offsets = [7, 0, 96], sizes = [1, 2, 96], strides = [1, 1, 1]} : vector<8x2x192xf32> to vector<1x2x96xf32>
    %22 = vector.shape_cast %21 : vector<1x2x96xf32> to vector<2x96xf32>
    %23 = vector.extract_strided_slice %20 {offsets = [0, 0], sizes = [2, 32], strides = [1, 1]} : vector<2x96xf32> to vector<2x32xf32>
    %24 = vector.extract_strided_slice %17 {offsets = [0, 0], sizes = [2, 32], strides = [1, 1]} : vector<2x96xf32> to vector<2x32xf32>
    %25 = arith.addf %23, %24 : vector<2x32xf32>
    %26 = arith.negf %25 : vector<2x32xf32>
    %27 = math.exp %26 : vector<2x32xf32>
    %cst_13 = arith.constant 1.000000e+00 : f32
    %28 = vector.broadcast %cst_13 : f32 to vector<2x32xf32>
    %29 = arith.addf %28, %27 : vector<2x32xf32>
    %30 = arith.divf %28, %29 : vector<2x32xf32>
    %31 = vector.extract_strided_slice %20 {offsets = [0, 32], sizes = [2, 32], strides = [1, 1]} : vector<2x96xf32> to vector<2x32xf32>
    %32 = vector.extract_strided_slice %17 {offsets = [0, 32], sizes = [2, 32], strides = [1, 1]} : vector<2x96xf32> to vector<2x32xf32>
    %33 = arith.addf %31, %32 : vector<2x32xf32>
    %34 = arith.negf %33 : vector<2x32xf32>
    %35 = math.exp %34 : vector<2x32xf32>
    %cst_14 = arith.constant 1.000000e+00 : f32
    %36 = vector.broadcast %cst_14 : f32 to vector<2x32xf32>
    %37 = arith.addf %36, %35 : vector<2x32xf32>
    %38 = arith.divf %36, %37 : vector<2x32xf32>
    %39 = vector.extract_strided_slice %20 {offsets = [0, 64], sizes = [2, 32], strides = [1, 1]} : vector<2x96xf32> to vector<2x32xf32>
    %40 = vector.extract_strided_slice %17 {offsets = [0, 64], sizes = [2, 32], strides = [1, 1]} : vector<2x96xf32> to vector<2x32xf32>
    %41 = arith.mulf %30, %40 : vector<2x32xf32>
    %42 = arith.addf %39, %41 : vector<2x32xf32>
    %43 = math.tanh %42 : vector<2x32xf32>
    %cst_15 = arith.constant 1.000000e+00 : f32
    %44 = vector.broadcast %cst_15 : f32 to vector<2x32xf32>
    %45 = arith.subf %44, %38 : vector<2x32xf32>
    %46 = arith.mulf %45, %43 : vector<2x32xf32>
    %47 = arith.mulf %38, %12 : vector<2x32xf32>
    %48 = arith.addf %46, %47 : vector<2x32xf32>
    %49 = vector.extract_strided_slice %22 {offsets = [0, 0], sizes = [2, 32], strides = [1, 1]} : vector<2x96xf32> to vector<2x32xf32>
    %50 = vector.extract_strided_slice %18 {offsets = [0, 0], sizes = [2, 32], strides = [1, 1]} : vector<2x96xf32> to vector<2x32xf32>
    %51 = arith.addf %49, %50 : vector<2x32xf32>
    %52 = arith.negf %51 : vector<2x32xf32>
    %53 = math.exp %52 : vector<2x32xf32>
    %cst_16 = arith.constant 1.000000e+00 : f32
    %54 = vector.broadcast %cst_16 : f32 to vector<2x32xf32>
    %55 = arith.addf %54, %53 : vector<2x32xf32>
    %56 = arith.divf %54, %55 : vector<2x32xf32>
    %57 = vector.extract_strided_slice %22 {offsets = [0, 32], sizes = [2, 32], strides = [1, 1]} : vector<2x96xf32> to vector<2x32xf32>
    %58 = vector.extract_strided_slice %18 {offsets = [0, 32], sizes = [2, 32], strides = [1, 1]} : vector<2x96xf32> to vector<2x32xf32>
    %59 = arith.addf %57, %58 : vector<2x32xf32>
    %60 = arith.negf %59 : vector<2x32xf32>
    %61 = math.exp %60 : vector<2x32xf32>
    %cst_17 = arith.constant 1.000000e+00 : f32
    %62 = vector.broadcast %cst_17 : f32 to vector<2x32xf32>
    %63 = arith.addf %62, %61 : vector<2x32xf32>
    %64 = arith.divf %62, %63 : vector<2x32xf32>
    %65 = vector.extract_strided_slice %22 {offsets = [0, 64], sizes = [2, 32], strides = [1, 1]} : vector<2x96xf32> to vector<2x32xf32>
    %66 = vector.extract_strided_slice %18 {offsets = [0, 64], sizes = [2, 32], strides = [1, 1]} : vector<2x96xf32> to vector<2x32xf32>
    %67 = arith.mulf %56, %66 : vector<2x32xf32>
    %68 = arith.addf %65, %67 : vector<2x32xf32>
    %69 = math.tanh %68 : vector<2x32xf32>
    %cst_18 = arith.constant 1.000000e+00 : f32
    %70 = vector.broadcast %cst_18 : f32 to vector<2x32xf32>
    %71 = arith.subf %70, %64 : vector<2x32xf32>
    %72 = arith.mulf %71, %69 : vector<2x32xf32>
    %73 = arith.mulf %64, %13 : vector<2x32xf32>
    %74 = arith.addf %72, %73 : vector<2x32xf32>
    %75 = tpu.concatenate %48, %74 in 1 : vector<2x32xf32>, vector<2x32xf32> -> vector<2x64xf32>
    %cst_19 = arith.constant dense<0.000000e+00> : vector<2x192xf32>
    %76 = tpu.matmul %75, %8, %cst_19 {dimension_numbers = #tpu.dot_dimension_numbers<[1], [0], [0], [1], [0, 0, 1, 1], [], []>} : vector<2x64xf32>, vector<64x192xf32>, vector<2x192xf32> -> vector<2x192xf32>
    %77 = arith.addf %76, %11 : vector<2x192xf32>
    %78 = vector.extract_strided_slice %77 {offsets = [0, 0], sizes = [2, 96], strides = [1, 1]} : vector<2x192xf32> to vector<2x96xf32>
    %79 = vector.extract_strided_slice %77 {offsets = [0, 96], sizes = [2, 96], strides = [1, 1]} : vector<2x192xf32> to vector<2x96xf32>
    %80 = vector.extract_strided_slice %7 {offsets = [1, 0, 0], sizes = [1, 2, 96], strides = [1, 1, 1]} : vector<8x2x192xf32> to vector<1x2x96xf32>
    %81 = vector.shape_cast %80 : vector<1x2x96xf32> to vector<2x96xf32>
    %82 = vector.extract_strided_slice %7 {offsets = [6, 0, 96], sizes = [1, 2, 96], strides = [1, 1, 1]} : vector<8x2x192xf32> to vector<1x2x96xf32>
    %83 = vector.shape_cast %82 : vector<1x2x96xf32> to vector<2x96xf32>
    %84 = vector.extract_strided_slice %81 {offsets = [0, 0], sizes = [2, 32], strides = [1, 1]} : vector<2x96xf32> to vector<2x32xf32>
    %85 = vector.extract_strided_slice %78 {offsets = [0, 0], sizes = [2, 32], strides = [1, 1]} : vector<2x96xf32> to vector<2x32xf32>
    %86 = arith.addf %84, %85 : vector<2x32xf32>
    %87 = arith.negf %86 : vector<2x32xf32>
    %88 = math.exp %87 : vector<2x32xf32>
    %cst_20 = arith.constant 1.000000e+00 : f32
    %89 = vector.broadcast %cst_20 : f32 to vector<2x32xf32>
    %90 = arith.addf %89, %88 : vector<2x32xf32>
    %91 = arith.divf %89, %90 : vector<2x32xf32>
    %92 = vector.extract_strided_slice %81 {offsets = [0, 32], sizes = [2, 32], strides = [1, 1]} : vector<2x96xf32> to vector<2x32xf32>
    %93 = vector.extract_strided_slice %78 {offsets = [0, 32], sizes = [2, 32], strides = [1, 1]} : vector<2x96xf32> to vector<2x32xf32>
    %94 = arith.addf %92, %93 : vector<2x32xf32>
    %95 = arith.negf %94 : vector<2x32xf32>
    %96 = math.exp %95 : vector<2x32xf32>
    %cst_21 = arith.constant 1.000000e+00 : f32
    %97 = vector.broadcast %cst_21 : f32 to vector<2x32xf32>
    %98 = arith.addf %97, %96 : vector<2x32xf32>
    %99 = arith.divf %97, %98 : vector<2x32xf32>
    %100 = vector.extract_strided_slice %81 {offsets = [0, 64], sizes = [2, 32], strides = [1, 1]} : vector<2x96xf32> to vector<2x32xf32>
    %101 = vector.extract_strided_slice %78 {offsets = [0, 64], sizes = [2, 32], strides = [1, 1]} : vector<2x96xf32> to vector<2x32xf32>
    %102 = arith.mulf %91, %101 : vector<2x32xf32>
    %103 = arith.addf %100, %102 : vector<2x32xf32>
    %104 = math.tanh %103 : vector<2x32xf32>
    %cst_22 = arith.constant 1.000000e+00 : f32
    %105 = vector.broadcast %cst_22 : f32 to vector<2x32xf32>
    %106 = arith.subf %105, %99 : vector<2x32xf32>
    %107 = arith.mulf %106, %104 : vector<2x32xf32>
    %108 = arith.mulf %99, %48 : vector<2x32xf32>
    %109 = arith.addf %107, %108 : vector<2x32xf32>
    %110 = vector.extract_strided_slice %83 {offsets = [0, 0], sizes = [2, 32], strides = [1, 1]} : vector<2x96xf32> to vector<2x32xf32>
    %111 = vector.extract_strided_slice %79 {offsets = [0, 0], sizes = [2, 32], strides = [1, 1]} : vector<2x96xf32> to vector<2x32xf32>
    %112 = arith.addf %110, %111 : vector<2x32xf32>
    %113 = arith.negf %112 : vector<2x32xf32>
    %114 = math.exp %113 : vector<2x32xf32>
    %cst_23 = arith.constant 1.000000e+00 : f32
    %115 = vector.broadcast %cst_23 : f32 to vector<2x32xf32>
    %116 = arith.addf %115, %114 : vector<2x32xf32>
    %117 = arith.divf %115, %116 : vector<2x32xf32>
    %118 = vector.extract_strided_slice %83 {offsets = [0, 32], sizes = [2, 32], strides = [1, 1]} : vector<2x96xf32> to vector<2x32xf32>
    %119 = vector.extract_strided_slice %79 {offsets = [0, 32], sizes = [2, 32], strides = [1, 1]} : vector<2x96xf32> to vector<2x32xf32>
    %120 = arith.addf %118, %119 : vector<2x32xf32>
    %121 = arith.negf %120 : vector<2x32xf32>
    %122 = math.exp %121 : vector<2x32xf32>
    %cst_24 = arith.constant 1.000000e+00 : f32
    %123 = vector.broadcast %cst_24 : f32 to vector<2x32xf32>
    %124 = arith.addf %123, %122 : vector<2x32xf32>
    %125 = arith.divf %123, %124 : vector<2x32xf32>
    %126 = vector.extract_strided_slice %83 {offsets = [0, 64], sizes = [2, 32], strides = [1, 1]} : vector<2x96xf32> to vector<2x32xf32>
    %127 = vector.extract_strided_slice %79 {offsets = [0, 64], sizes = [2, 32], strides = [1, 1]} : vector<2x96xf32> to vector<2x32xf32>
    %128 = arith.mulf %117, %127 : vector<2x32xf32>
    %129 = arith.addf %126, %128 : vector<2x32xf32>
    %130 = math.tanh %129 : vector<2x32xf32>
    %cst_25 = arith.constant 1.000000e+00 : f32
    %131 = vector.broadcast %cst_25 : f32 to vector<2x32xf32>
    %132 = arith.subf %131, %125 : vector<2x32xf32>
    %133 = arith.mulf %132, %130 : vector<2x32xf32>
    %134 = arith.mulf %125, %74 : vector<2x32xf32>
    %135 = arith.addf %133, %134 : vector<2x32xf32>
    %136 = tpu.concatenate %109, %135 in 1 : vector<2x32xf32>, vector<2x32xf32> -> vector<2x64xf32>
    %cst_26 = arith.constant dense<0.000000e+00> : vector<2x192xf32>
    %137 = tpu.matmul %136, %8, %cst_26 {dimension_numbers = #tpu.dot_dimension_numbers<[1], [0], [0], [1], [0, 0, 1, 1], [], []>} : vector<2x64xf32>, vector<64x192xf32>, vector<2x192xf32> -> vector<2x192xf32>
    %138 = arith.addf %137, %11 : vector<2x192xf32>
    %139 = vector.extract_strided_slice %138 {offsets = [0, 0], sizes = [2, 96], strides = [1, 1]} : vector<2x192xf32> to vector<2x96xf32>
    %140 = vector.extract_strided_slice %138 {offsets = [0, 96], sizes = [2, 96], strides = [1, 1]} : vector<2x192xf32> to vector<2x96xf32>
    %141 = vector.extract_strided_slice %7 {offsets = [2, 0, 0], sizes = [1, 2, 96], strides = [1, 1, 1]} : vector<8x2x192xf32> to vector<1x2x96xf32>
    %142 = vector.shape_cast %141 : vector<1x2x96xf32> to vector<2x96xf32>
    %143 = vector.extract_strided_slice %7 {offsets = [5, 0, 96], sizes = [1, 2, 96], strides = [1, 1, 1]} : vector<8x2x192xf32> to vector<1x2x96xf32>
    %144 = vector.shape_cast %143 : vector<1x2x96xf32> to vector<2x96xf32>
    %145 = vector.extract_strided_slice %142 {offsets = [0, 0], sizes = [2, 32], strides = [1, 1]} : vector<2x96xf32> to vector<2x32xf32>
    %146 = vector.extract_strided_slice %139 {offsets = [0, 0], sizes = [2, 32], strides = [1, 1]} : vector<2x96xf32> to vector<2x32xf32>
    %147 = arith.addf %145, %146 : vector<2x32xf32>
    %148 = arith.negf %147 : vector<2x32xf32>
    %149 = math.exp %148 : vector<2x32xf32>
    %cst_27 = arith.constant 1.000000e+00 : f32
    %150 = vector.broadcast %cst_27 : f32 to vector<2x32xf32>
    %151 = arith.addf %150, %149 : vector<2x32xf32>
    %152 = arith.divf %150, %151 : vector<2x32xf32>
    %153 = vector.extract_strided_slice %142 {offsets = [0, 32], sizes = [2, 32], strides = [1, 1]} : vector<2x96xf32> to vector<2x32xf32>
    %154 = vector.extract_strided_slice %139 {offsets = [0, 32], sizes = [2, 32], strides = [1, 1]} : vector<2x96xf32> to vector<2x32xf32>
    %155 = arith.addf %153, %154 : vector<2x32xf32>
    %156 = arith.negf %155 : vector<2x32xf32>
    %157 = math.exp %156 : vector<2x32xf32>
    %cst_28 = arith.constant 1.000000e+00 : f32
    %158 = vector.broadcast %cst_28 : f32 to vector<2x32xf32>
    %159 = arith.addf %158, %157 : vector<2x32xf32>
    %160 = arith.divf %158, %159 : vector<2x32xf32>
    %161 = vector.extract_strided_slice %142 {offsets = [0, 64], sizes = [2, 32], strides = [1, 1]} : vector<2x96xf32> to vector<2x32xf32>
    %162 = vector.extract_strided_slice %139 {offsets = [0, 64], sizes = [2, 32], strides = [1, 1]} : vector<2x96xf32> to vector<2x32xf32>
    %163 = arith.mulf %152, %162 : vector<2x32xf32>
    %164 = arith.addf %161, %163 : vector<2x32xf32>
    %165 = math.tanh %164 : vector<2x32xf32>
    %cst_29 = arith.constant 1.000000e+00 : f32
    %166 = vector.broadcast %cst_29 : f32 to vector<2x32xf32>
    %167 = arith.subf %166, %160 : vector<2x32xf32>
    %168 = arith.mulf %167, %165 : vector<2x32xf32>
    %169 = arith.mulf %160, %109 : vector<2x32xf32>
    %170 = arith.addf %168, %169 : vector<2x32xf32>
    %171 = vector.extract_strided_slice %144 {offsets = [0, 0], sizes = [2, 32], strides = [1, 1]} : vector<2x96xf32> to vector<2x32xf32>
    %172 = vector.extract_strided_slice %140 {offsets = [0, 0], sizes = [2, 32], strides = [1, 1]} : vector<2x96xf32> to vector<2x32xf32>
    %173 = arith.addf %171, %172 : vector<2x32xf32>
    %174 = arith.negf %173 : vector<2x32xf32>
    %175 = math.exp %174 : vector<2x32xf32>
    %cst_30 = arith.constant 1.000000e+00 : f32
    %176 = vector.broadcast %cst_30 : f32 to vector<2x32xf32>
    %177 = arith.addf %176, %175 : vector<2x32xf32>
    %178 = arith.divf %176, %177 : vector<2x32xf32>
    %179 = vector.extract_strided_slice %144 {offsets = [0, 32], sizes = [2, 32], strides = [1, 1]} : vector<2x96xf32> to vector<2x32xf32>
    %180 = vector.extract_strided_slice %140 {offsets = [0, 32], sizes = [2, 32], strides = [1, 1]} : vector<2x96xf32> to vector<2x32xf32>
    %181 = arith.addf %179, %180 : vector<2x32xf32>
    %182 = arith.negf %181 : vector<2x32xf32>
    %183 = math.exp %182 : vector<2x32xf32>
    %cst_31 = arith.constant 1.000000e+00 : f32
    %184 = vector.broadcast %cst_31 : f32 to vector<2x32xf32>
    %185 = arith.addf %184, %183 : vector<2x32xf32>
    %186 = arith.divf %184, %185 : vector<2x32xf32>
    %187 = vector.extract_strided_slice %144 {offsets = [0, 64], sizes = [2, 32], strides = [1, 1]} : vector<2x96xf32> to vector<2x32xf32>
    %188 = vector.extract_strided_slice %140 {offsets = [0, 64], sizes = [2, 32], strides = [1, 1]} : vector<2x96xf32> to vector<2x32xf32>
    %189 = arith.mulf %178, %188 : vector<2x32xf32>
    %190 = arith.addf %187, %189 : vector<2x32xf32>
    %191 = math.tanh %190 : vector<2x32xf32>
    %cst_32 = arith.constant 1.000000e+00 : f32
    %192 = vector.broadcast %cst_32 : f32 to vector<2x32xf32>
    %193 = arith.subf %192, %186 : vector<2x32xf32>
    %194 = arith.mulf %193, %191 : vector<2x32xf32>
    %195 = arith.mulf %186, %135 : vector<2x32xf32>
    %196 = arith.addf %194, %195 : vector<2x32xf32>
    %197 = tpu.concatenate %170, %196 in 1 : vector<2x32xf32>, vector<2x32xf32> -> vector<2x64xf32>
    %cst_33 = arith.constant dense<0.000000e+00> : vector<2x192xf32>
    %198 = tpu.matmul %197, %8, %cst_33 {dimension_numbers = #tpu.dot_dimension_numbers<[1], [0], [0], [1], [0, 0, 1, 1], [], []>} : vector<2x64xf32>, vector<64x192xf32>, vector<2x192xf32> -> vector<2x192xf32>
    %199 = arith.addf %198, %11 : vector<2x192xf32>
    %200 = vector.extract_strided_slice %199 {offsets = [0, 0], sizes = [2, 96], strides = [1, 1]} : vector<2x192xf32> to vector<2x96xf32>
    %201 = vector.extract_strided_slice %199 {offsets = [0, 96], sizes = [2, 96], strides = [1, 1]} : vector<2x192xf32> to vector<2x96xf32>
    %202 = vector.extract_strided_slice %7 {offsets = [3, 0, 0], sizes = [1, 2, 96], strides = [1, 1, 1]} : vector<8x2x192xf32> to vector<1x2x96xf32>
    %203 = vector.shape_cast %202 : vector<1x2x96xf32> to vector<2x96xf32>
    %204 = vector.extract_strided_slice %7 {offsets = [4, 0, 96], sizes = [1, 2, 96], strides = [1, 1, 1]} : vector<8x2x192xf32> to vector<1x2x96xf32>
    %205 = vector.shape_cast %204 : vector<1x2x96xf32> to vector<2x96xf32>
    %206 = vector.extract_strided_slice %203 {offsets = [0, 0], sizes = [2, 32], strides = [1, 1]} : vector<2x96xf32> to vector<2x32xf32>
    %207 = vector.extract_strided_slice %200 {offsets = [0, 0], sizes = [2, 32], strides = [1, 1]} : vector<2x96xf32> to vector<2x32xf32>
    %208 = arith.addf %206, %207 : vector<2x32xf32>
    %209 = arith.negf %208 : vector<2x32xf32>
    %210 = math.exp %209 : vector<2x32xf32>
    %cst_34 = arith.constant 1.000000e+00 : f32
    %211 = vector.broadcast %cst_34 : f32 to vector<2x32xf32>
    %212 = arith.addf %211, %210 : vector<2x32xf32>
    %213 = arith.divf %211, %212 : vector<2x32xf32>
    %214 = vector.extract_strided_slice %203 {offsets = [0, 32], sizes = [2, 32], strides = [1, 1]} : vector<2x96xf32> to vector<2x32xf32>
    %215 = vector.extract_strided_slice %200 {offsets = [0, 32], sizes = [2, 32], strides = [1, 1]} : vector<2x96xf32> to vector<2x32xf32>
    %216 = arith.addf %214, %215 : vector<2x32xf32>
    %217 = arith.negf %216 : vector<2x32xf32>
    %218 = math.exp %217 : vector<2x32xf32>
    %cst_35 = arith.constant 1.000000e+00 : f32
    %219 = vector.broadcast %cst_35 : f32 to vector<2x32xf32>
    %220 = arith.addf %219, %218 : vector<2x32xf32>
    %221 = arith.divf %219, %220 : vector<2x32xf32>
    %222 = vector.extract_strided_slice %203 {offsets = [0, 64], sizes = [2, 32], strides = [1, 1]} : vector<2x96xf32> to vector<2x32xf32>
    %223 = vector.extract_strided_slice %200 {offsets = [0, 64], sizes = [2, 32], strides = [1, 1]} : vector<2x96xf32> to vector<2x32xf32>
    %224 = arith.mulf %213, %223 : vector<2x32xf32>
    %225 = arith.addf %222, %224 : vector<2x32xf32>
    %226 = math.tanh %225 : vector<2x32xf32>
    %cst_36 = arith.constant 1.000000e+00 : f32
    %227 = vector.broadcast %cst_36 : f32 to vector<2x32xf32>
    %228 = arith.subf %227, %221 : vector<2x32xf32>
    %229 = arith.mulf %228, %226 : vector<2x32xf32>
    %230 = arith.mulf %221, %170 : vector<2x32xf32>
    %231 = arith.addf %229, %230 : vector<2x32xf32>
    %232 = vector.extract_strided_slice %205 {offsets = [0, 0], sizes = [2, 32], strides = [1, 1]} : vector<2x96xf32> to vector<2x32xf32>
    %233 = vector.extract_strided_slice %201 {offsets = [0, 0], sizes = [2, 32], strides = [1, 1]} : vector<2x96xf32> to vector<2x32xf32>
    %234 = arith.addf %232, %233 : vector<2x32xf32>
    %235 = arith.negf %234 : vector<2x32xf32>
    %236 = math.exp %235 : vector<2x32xf32>
    %cst_37 = arith.constant 1.000000e+00 : f32
    %237 = vector.broadcast %cst_37 : f32 to vector<2x32xf32>
    %238 = arith.addf %237, %236 : vector<2x32xf32>
    %239 = arith.divf %237, %238 : vector<2x32xf32>
    %240 = vector.extract_strided_slice %205 {offsets = [0, 32], sizes = [2, 32], strides = [1, 1]} : vector<2x96xf32> to vector<2x32xf32>
    %241 = vector.extract_strided_slice %201 {offsets = [0, 32], sizes = [2, 32], strides = [1, 1]} : vector<2x96xf32> to vector<2x32xf32>
    %242 = arith.addf %240, %241 : vector<2x32xf32>
    %243 = arith.negf %242 : vector<2x32xf32>
    %244 = math.exp %243 : vector<2x32xf32>
    %cst_38 = arith.constant 1.000000e+00 : f32
    %245 = vector.broadcast %cst_38 : f32 to vector<2x32xf32>
    %246 = arith.addf %245, %244 : vector<2x32xf32>
    %247 = arith.divf %245, %246 : vector<2x32xf32>
    %248 = vector.extract_strided_slice %205 {offsets = [0, 64], sizes = [2, 32], strides = [1, 1]} : vector<2x96xf32> to vector<2x32xf32>
    %249 = vector.extract_strided_slice %201 {offsets = [0, 64], sizes = [2, 32], strides = [1, 1]} : vector<2x96xf32> to vector<2x32xf32>
    %250 = arith.mulf %239, %249 : vector<2x32xf32>
    %251 = arith.addf %248, %250 : vector<2x32xf32>
    %252 = math.tanh %251 : vector<2x32xf32>
    %cst_39 = arith.constant 1.000000e+00 : f32
    %253 = vector.broadcast %cst_39 : f32 to vector<2x32xf32>
    %254 = arith.subf %253, %247 : vector<2x32xf32>
    %255 = arith.mulf %254, %252 : vector<2x32xf32>
    %256 = arith.mulf %247, %196 : vector<2x32xf32>
    %257 = arith.addf %255, %256 : vector<2x32xf32>
    %258 = tpu.concatenate %231, %257 in 1 : vector<2x32xf32>, vector<2x32xf32> -> vector<2x64xf32>
    %cst_40 = arith.constant dense<0.000000e+00> : vector<2x192xf32>
    %259 = tpu.matmul %258, %8, %cst_40 {dimension_numbers = #tpu.dot_dimension_numbers<[1], [0], [0], [1], [0, 0, 1, 1], [], []>} : vector<2x64xf32>, vector<64x192xf32>, vector<2x192xf32> -> vector<2x192xf32>
    %260 = arith.addf %259, %11 : vector<2x192xf32>
    %261 = vector.extract_strided_slice %260 {offsets = [0, 0], sizes = [2, 96], strides = [1, 1]} : vector<2x192xf32> to vector<2x96xf32>
    %262 = vector.extract_strided_slice %260 {offsets = [0, 96], sizes = [2, 96], strides = [1, 1]} : vector<2x192xf32> to vector<2x96xf32>
    %263 = vector.extract_strided_slice %7 {offsets = [4, 0, 0], sizes = [1, 2, 96], strides = [1, 1, 1]} : vector<8x2x192xf32> to vector<1x2x96xf32>
    %264 = vector.shape_cast %263 : vector<1x2x96xf32> to vector<2x96xf32>
    %265 = vector.extract_strided_slice %7 {offsets = [3, 0, 96], sizes = [1, 2, 96], strides = [1, 1, 1]} : vector<8x2x192xf32> to vector<1x2x96xf32>
    %266 = vector.shape_cast %265 : vector<1x2x96xf32> to vector<2x96xf32>
    %267 = vector.extract_strided_slice %264 {offsets = [0, 0], sizes = [2, 32], strides = [1, 1]} : vector<2x96xf32> to vector<2x32xf32>
    %268 = vector.extract_strided_slice %261 {offsets = [0, 0], sizes = [2, 32], strides = [1, 1]} : vector<2x96xf32> to vector<2x32xf32>
    %269 = arith.addf %267, %268 : vector<2x32xf32>
    %270 = arith.negf %269 : vector<2x32xf32>
    %271 = math.exp %270 : vector<2x32xf32>
    %cst_41 = arith.constant 1.000000e+00 : f32
    %272 = vector.broadcast %cst_41 : f32 to vector<2x32xf32>
    %273 = arith.addf %272, %271 : vector<2x32xf32>
    %274 = arith.divf %272, %273 : vector<2x32xf32>
    %275 = vector.extract_strided_slice %264 {offsets = [0, 32], sizes = [2, 32], strides = [1, 1]} : vector<2x96xf32> to vector<2x32xf32>
    %276 = vector.extract_strided_slice %261 {offsets = [0, 32], sizes = [2, 32], strides = [1, 1]} : vector<2x96xf32> to vector<2x32xf32>
    %277 = arith.addf %275, %276 : vector<2x32xf32>
    %278 = arith.negf %277 : vector<2x32xf32>
    %279 = math.exp %278 : vector<2x32xf32>
    %cst_42 = arith.constant 1.000000e+00 : f32
    %280 = vector.broadcast %cst_42 : f32 to vector<2x32xf32>
    %281 = arith.addf %280, %279 : vector<2x32xf32>
    %282 = arith.divf %280, %281 : vector<2x32xf32>
    %283 = vector.extract_strided_slice %264 {offsets = [0, 64], sizes = [2, 32], strides = [1, 1]} : vector<2x96xf32> to vector<2x32xf32>
    %284 = vector.extract_strided_slice %261 {offsets = [0, 64], sizes = [2, 32], strides = [1, 1]} : vector<2x96xf32> to vector<2x32xf32>
    %285 = arith.mulf %274, %284 : vector<2x32xf32>
    %286 = arith.addf %283, %285 : vector<2x32xf32>
    %287 = math.tanh %286 : vector<2x32xf32>
    %cst_43 = arith.constant 1.000000e+00 : f32
    %288 = vector.broadcast %cst_43 : f32 to vector<2x32xf32>
    %289 = arith.subf %288, %282 : vector<2x32xf32>
    %290 = arith.mulf %289, %287 : vector<2x32xf32>
    %291 = arith.mulf %282, %231 : vector<2x32xf32>
    %292 = arith.addf %290, %291 : vector<2x32xf32>
    %293 = vector.extract_strided_slice %266 {offsets = [0, 0], sizes = [2, 32], strides = [1, 1]} : vector<2x96xf32> to vector<2x32xf32>
    %294 = vector.extract_strided_slice %262 {offsets = [0, 0], sizes = [2, 32], strides = [1, 1]} : vector<2x96xf32> to vector<2x32xf32>
    %295 = arith.addf %293, %294 : vector<2x32xf32>
    %296 = arith.negf %295 : vector<2x32xf32>
    %297 = math.exp %296 : vector<2x32xf32>
    %cst_44 = arith.constant 1.000000e+00 : f32
    %298 = vector.broadcast %cst_44 : f32 to vector<2x32xf32>
    %299 = arith.addf %298, %297 : vector<2x32xf32>
    %300 = arith.divf %298, %299 : vector<2x32xf32>
    %301 = vector.extract_strided_slice %266 {offsets = [0, 32], sizes = [2, 32], strides = [1, 1]} : vector<2x96xf32> to vector<2x32xf32>
    %302 = vector.extract_strided_slice %262 {offsets = [0, 32], sizes = [2, 32], strides = [1, 1]} : vector<2x96xf32> to vector<2x32xf32>
    %303 = arith.addf %301, %302 : vector<2x32xf32>
    %304 = arith.negf %303 : vector<2x32xf32>
    %305 = math.exp %304 : vector<2x32xf32>
    %cst_45 = arith.constant 1.000000e+00 : f32
    %306 = vector.broadcast %cst_45 : f32 to vector<2x32xf32>
    %307 = arith.addf %306, %305 : vector<2x32xf32>
    %308 = arith.divf %306, %307 : vector<2x32xf32>
    %309 = vector.extract_strided_slice %266 {offsets = [0, 64], sizes = [2, 32], strides = [1, 1]} : vector<2x96xf32> to vector<2x32xf32>
    %310 = vector.extract_strided_slice %262 {offsets = [0, 64], sizes = [2, 32], strides = [1, 1]} : vector<2x96xf32> to vector<2x32xf32>
    %311 = arith.mulf %300, %310 : vector<2x32xf32>
    %312 = arith.addf %309, %311 : vector<2x32xf32>
    %313 = math.tanh %312 : vector<2x32xf32>
    %cst_46 = arith.constant 1.000000e+00 : f32
    %314 = vector.broadcast %cst_46 : f32 to vector<2x32xf32>
    %315 = arith.subf %314, %308 : vector<2x32xf32>
    %316 = arith.mulf %315, %313 : vector<2x32xf32>
    %317 = arith.mulf %308, %257 : vector<2x32xf32>
    %318 = arith.addf %316, %317 : vector<2x32xf32>
    %319 = tpu.concatenate %292, %318 in 1 : vector<2x32xf32>, vector<2x32xf32> -> vector<2x64xf32>
    %cst_47 = arith.constant dense<0.000000e+00> : vector<2x192xf32>
    %320 = tpu.matmul %319, %8, %cst_47 {dimension_numbers = #tpu.dot_dimension_numbers<[1], [0], [0], [1], [0, 0, 1, 1], [], []>} : vector<2x64xf32>, vector<64x192xf32>, vector<2x192xf32> -> vector<2x192xf32>
    %321 = arith.addf %320, %11 : vector<2x192xf32>
    %322 = vector.extract_strided_slice %321 {offsets = [0, 0], sizes = [2, 96], strides = [1, 1]} : vector<2x192xf32> to vector<2x96xf32>
    %323 = vector.extract_strided_slice %321 {offsets = [0, 96], sizes = [2, 96], strides = [1, 1]} : vector<2x192xf32> to vector<2x96xf32>
    %324 = vector.extract_strided_slice %7 {offsets = [5, 0, 0], sizes = [1, 2, 96], strides = [1, 1, 1]} : vector<8x2x192xf32> to vector<1x2x96xf32>
    %325 = vector.shape_cast %324 : vector<1x2x96xf32> to vector<2x96xf32>
    %326 = vector.extract_strided_slice %7 {offsets = [2, 0, 96], sizes = [1, 2, 96], strides = [1, 1, 1]} : vector<8x2x192xf32> to vector<1x2x96xf32>
    %327 = vector.shape_cast %326 : vector<1x2x96xf32> to vector<2x96xf32>
    %328 = vector.extract_strided_slice %325 {offsets = [0, 0], sizes = [2, 32], strides = [1, 1]} : vector<2x96xf32> to vector<2x32xf32>
    %329 = vector.extract_strided_slice %322 {offsets = [0, 0], sizes = [2, 32], strides = [1, 1]} : vector<2x96xf32> to vector<2x32xf32>
    %330 = arith.addf %328, %329 : vector<2x32xf32>
    %331 = arith.negf %330 : vector<2x32xf32>
    %332 = math.exp %331 : vector<2x32xf32>
    %cst_48 = arith.constant 1.000000e+00 : f32
    %333 = vector.broadcast %cst_48 : f32 to vector<2x32xf32>
    %334 = arith.addf %333, %332 : vector<2x32xf32>
    %335 = arith.divf %333, %334 : vector<2x32xf32>
    %336 = vector.extract_strided_slice %325 {offsets = [0, 32], sizes = [2, 32], strides = [1, 1]} : vector<2x96xf32> to vector<2x32xf32>
    %337 = vector.extract_strided_slice %322 {offsets = [0, 32], sizes = [2, 32], strides = [1, 1]} : vector<2x96xf32> to vector<2x32xf32>
    %338 = arith.addf %336, %337 : vector<2x32xf32>
    %339 = arith.negf %338 : vector<2x32xf32>
    %340 = math.exp %339 : vector<2x32xf32>
    %cst_49 = arith.constant 1.000000e+00 : f32
    %341 = vector.broadcast %cst_49 : f32 to vector<2x32xf32>
    %342 = arith.addf %341, %340 : vector<2x32xf32>
    %343 = arith.divf %341, %342 : vector<2x32xf32>
    %344 = vector.extract_strided_slice %325 {offsets = [0, 64], sizes = [2, 32], strides = [1, 1]} : vector<2x96xf32> to vector<2x32xf32>
    %345 = vector.extract_strided_slice %322 {offsets = [0, 64], sizes = [2, 32], strides = [1, 1]} : vector<2x96xf32> to vector<2x32xf32>
    %346 = arith.mulf %335, %345 : vector<2x32xf32>
    %347 = arith.addf %344, %346 : vector<2x32xf32>
    %348 = math.tanh %347 : vector<2x32xf32>
    %cst_50 = arith.constant 1.000000e+00 : f32
    %349 = vector.broadcast %cst_50 : f32 to vector<2x32xf32>
    %350 = arith.subf %349, %343 : vector<2x32xf32>
    %351 = arith.mulf %350, %348 : vector<2x32xf32>
    %352 = arith.mulf %343, %292 : vector<2x32xf32>
    %353 = arith.addf %351, %352 : vector<2x32xf32>
    %354 = vector.extract_strided_slice %327 {offsets = [0, 0], sizes = [2, 32], strides = [1, 1]} : vector<2x96xf32> to vector<2x32xf32>
    %355 = vector.extract_strided_slice %323 {offsets = [0, 0], sizes = [2, 32], strides = [1, 1]} : vector<2x96xf32> to vector<2x32xf32>
    %356 = arith.addf %354, %355 : vector<2x32xf32>
    %357 = arith.negf %356 : vector<2x32xf32>
    %358 = math.exp %357 : vector<2x32xf32>
    %cst_51 = arith.constant 1.000000e+00 : f32
    %359 = vector.broadcast %cst_51 : f32 to vector<2x32xf32>
    %360 = arith.addf %359, %358 : vector<2x32xf32>
    %361 = arith.divf %359, %360 : vector<2x32xf32>
    %362 = vector.extract_strided_slice %327 {offsets = [0, 32], sizes = [2, 32], strides = [1, 1]} : vector<2x96xf32> to vector<2x32xf32>
    %363 = vector.extract_strided_slice %323 {offsets = [0, 32], sizes = [2, 32], strides = [1, 1]} : vector<2x96xf32> to vector<2x32xf32>
    %364 = arith.addf %362, %363 : vector<2x32xf32>
    %365 = arith.negf %364 : vector<2x32xf32>
    %366 = math.exp %365 : vector<2x32xf32>
    %cst_52 = arith.constant 1.000000e+00 : f32
    %367 = vector.broadcast %cst_52 : f32 to vector<2x32xf32>
    %368 = arith.addf %367, %366 : vector<2x32xf32>
    %369 = arith.divf %367, %368 : vector<2x32xf32>
    %370 = vector.extract_strided_slice %327 {offsets = [0, 64], sizes = [2, 32], strides = [1, 1]} : vector<2x96xf32> to vector<2x32xf32>
    %371 = vector.extract_strided_slice %323 {offsets = [0, 64], sizes = [2, 32], strides = [1, 1]} : vector<2x96xf32> to vector<2x32xf32>
    %372 = arith.mulf %361, %371 : vector<2x32xf32>
    %373 = arith.addf %370, %372 : vector<2x32xf32>
    %374 = math.tanh %373 : vector<2x32xf32>
    %cst_53 = arith.constant 1.000000e+00 : f32
    %375 = vector.broadcast %cst_53 : f32 to vector<2x32xf32>
    %376 = arith.subf %375, %369 : vector<2x32xf32>
    %377 = arith.mulf %376, %374 : vector<2x32xf32>
    %378 = arith.mulf %369, %318 : vector<2x32xf32>
    %379 = arith.addf %377, %378 : vector<2x32xf32>
    %380 = tpu.concatenate %353, %379 in 1 : vector<2x32xf32>, vector<2x32xf32> -> vector<2x64xf32>
    %cst_54 = arith.constant dense<0.000000e+00> : vector<2x192xf32>
    %381 = tpu.matmul %380, %8, %cst_54 {dimension_numbers = #tpu.dot_dimension_numbers<[1], [0], [0], [1], [0, 0, 1, 1], [], []>} : vector<2x64xf32>, vector<64x192xf32>, vector<2x192xf32> -> vector<2x192xf32>
    %382 = arith.addf %381, %11 : vector<2x192xf32>
    %383 = vector.extract_strided_slice %382 {offsets = [0, 0], sizes = [2, 96], strides = [1, 1]} : vector<2x192xf32> to vector<2x96xf32>
    %384 = vector.extract_strided_slice %382 {offsets = [0, 96], sizes = [2, 96], strides = [1, 1]} : vector<2x192xf32> to vector<2x96xf32>
    %385 = vector.extract_strided_slice %7 {offsets = [6, 0, 0], sizes = [1, 2, 96], strides = [1, 1, 1]} : vector<8x2x192xf32> to vector<1x2x96xf32>
    %386 = vector.shape_cast %385 : vector<1x2x96xf32> to vector<2x96xf32>
    %387 = vector.extract_strided_slice %7 {offsets = [1, 0, 96], sizes = [1, 2, 96], strides = [1, 1, 1]} : vector<8x2x192xf32> to vector<1x2x96xf32>
    %388 = vector.shape_cast %387 : vector<1x2x96xf32> to vector<2x96xf32>
    %389 = vector.extract_strided_slice %386 {offsets = [0, 0], sizes = [2, 32], strides = [1, 1]} : vector<2x96xf32> to vector<2x32xf32>
    %390 = vector.extract_strided_slice %383 {offsets = [0, 0], sizes = [2, 32], strides = [1, 1]} : vector<2x96xf32> to vector<2x32xf32>
    %391 = arith.addf %389, %390 : vector<2x32xf32>
    %392 = arith.negf %391 : vector<2x32xf32>
    %393 = math.exp %392 : vector<2x32xf32>
    %cst_55 = arith.constant 1.000000e+00 : f32
    %394 = vector.broadcast %cst_55 : f32 to vector<2x32xf32>
    %395 = arith.addf %394, %393 : vector<2x32xf32>
    %396 = arith.divf %394, %395 : vector<2x32xf32>
    %397 = vector.extract_strided_slice %386 {offsets = [0, 32], sizes = [2, 32], strides = [1, 1]} : vector<2x96xf32> to vector<2x32xf32>
    %398 = vector.extract_strided_slice %383 {offsets = [0, 32], sizes = [2, 32], strides = [1, 1]} : vector<2x96xf32> to vector<2x32xf32>
    %399 = arith.addf %397, %398 : vector<2x32xf32>
    %400 = arith.negf %399 : vector<2x32xf32>
    %401 = math.exp %400 : vector<2x32xf32>
    %cst_56 = arith.constant 1.000000e+00 : f32
    %402 = vector.broadcast %cst_56 : f32 to vector<2x32xf32>
    %403 = arith.addf %402, %401 : vector<2x32xf32>
    %404 = arith.divf %402, %403 : vector<2x32xf32>
    %405 = vector.extract_strided_slice %386 {offsets = [0, 64], sizes = [2, 32], strides = [1, 1]} : vector<2x96xf32> to vector<2x32xf32>
    %406 = vector.extract_strided_slice %383 {offsets = [0, 64], sizes = [2, 32], strides = [1, 1]} : vector<2x96xf32> to vector<2x32xf32>
    %407 = arith.mulf %396, %406 : vector<2x32xf32>
    %408 = arith.addf %405, %407 : vector<2x32xf32>
    %409 = math.tanh %408 : vector<2x32xf32>
    %cst_57 = arith.constant 1.000000e+00 : f32
    %410 = vector.broadcast %cst_57 : f32 to vector<2x32xf32>
    %411 = arith.subf %410, %404 : vector<2x32xf32>
    %412 = arith.mulf %411, %409 : vector<2x32xf32>
    %413 = arith.mulf %404, %353 : vector<2x32xf32>
    %414 = arith.addf %412, %413 : vector<2x32xf32>
    %415 = vector.extract_strided_slice %388 {offsets = [0, 0], sizes = [2, 32], strides = [1, 1]} : vector<2x96xf32> to vector<2x32xf32>
    %416 = vector.extract_strided_slice %384 {offsets = [0, 0], sizes = [2, 32], strides = [1, 1]} : vector<2x96xf32> to vector<2x32xf32>
    %417 = arith.addf %415, %416 : vector<2x32xf32>
    %418 = arith.negf %417 : vector<2x32xf32>
    %419 = math.exp %418 : vector<2x32xf32>
    %cst_58 = arith.constant 1.000000e+00 : f32
    %420 = vector.broadcast %cst_58 : f32 to vector<2x32xf32>
    %421 = arith.addf %420, %419 : vector<2x32xf32>
    %422 = arith.divf %420, %421 : vector<2x32xf32>
    %423 = vector.extract_strided_slice %388 {offsets = [0, 32], sizes = [2, 32], strides = [1, 1]} : vector<2x96xf32> to vector<2x32xf32>
    %424 = vector.extract_strided_slice %384 {offsets = [0, 32], sizes = [2, 32], strides = [1, 1]} : vector<2x96xf32> to vector<2x32xf32>
    %425 = arith.addf %423, %424 : vector<2x32xf32>
    %426 = arith.negf %425 : vector<2x32xf32>
    %427 = math.exp %426 : vector<2x32xf32>
    %cst_59 = arith.constant 1.000000e+00 : f32
    %428 = vector.broadcast %cst_59 : f32 to vector<2x32xf32>
    %429 = arith.addf %428, %427 : vector<2x32xf32>
    %430 = arith.divf %428, %429 : vector<2x32xf32>
    %431 = vector.extract_strided_slice %388 {offsets = [0, 64], sizes = [2, 32], strides = [1, 1]} : vector<2x96xf32> to vector<2x32xf32>
    %432 = vector.extract_strided_slice %384 {offsets = [0, 64], sizes = [2, 32], strides = [1, 1]} : vector<2x96xf32> to vector<2x32xf32>
    %433 = arith.mulf %422, %432 : vector<2x32xf32>
    %434 = arith.addf %431, %433 : vector<2x32xf32>
    %435 = math.tanh %434 : vector<2x32xf32>
    %cst_60 = arith.constant 1.000000e+00 : f32
    %436 = vector.broadcast %cst_60 : f32 to vector<2x32xf32>
    %437 = arith.subf %436, %430 : vector<2x32xf32>
    %438 = arith.mulf %437, %435 : vector<2x32xf32>
    %439 = arith.mulf %430, %379 : vector<2x32xf32>
    %440 = arith.addf %438, %439 : vector<2x32xf32>
    %441 = tpu.concatenate %414, %440 in 1 : vector<2x32xf32>, vector<2x32xf32> -> vector<2x64xf32>
    %cst_61 = arith.constant dense<0.000000e+00> : vector<2x192xf32>
    %442 = tpu.matmul %441, %8, %cst_61 {dimension_numbers = #tpu.dot_dimension_numbers<[1], [0], [0], [1], [0, 0, 1, 1], [], []>} : vector<2x64xf32>, vector<64x192xf32>, vector<2x192xf32> -> vector<2x192xf32>
    %443 = arith.addf %442, %11 : vector<2x192xf32>
    %444 = vector.extract_strided_slice %443 {offsets = [0, 0], sizes = [2, 96], strides = [1, 1]} : vector<2x192xf32> to vector<2x96xf32>
    %445 = vector.extract_strided_slice %443 {offsets = [0, 96], sizes = [2, 96], strides = [1, 1]} : vector<2x192xf32> to vector<2x96xf32>
    %446 = vector.extract_strided_slice %7 {offsets = [7, 0, 0], sizes = [1, 2, 96], strides = [1, 1, 1]} : vector<8x2x192xf32> to vector<1x2x96xf32>
    %447 = vector.shape_cast %446 : vector<1x2x96xf32> to vector<2x96xf32>
    %448 = vector.extract_strided_slice %7 {offsets = [0, 0, 96], sizes = [1, 2, 96], strides = [1, 1, 1]} : vector<8x2x192xf32> to vector<1x2x96xf32>
    %449 = vector.shape_cast %448 : vector<1x2x96xf32> to vector<2x96xf32>
    %450 = vector.extract_strided_slice %447 {offsets = [0, 0], sizes = [2, 32], strides = [1, 1]} : vector<2x96xf32> to vector<2x32xf32>
    %451 = vector.extract_strided_slice %444 {offsets = [0, 0], sizes = [2, 32], strides = [1, 1]} : vector<2x96xf32> to vector<2x32xf32>
    %452 = arith.addf %450, %451 : vector<2x32xf32>
    %453 = arith.negf %452 : vector<2x32xf32>
    %454 = math.exp %453 : vector<2x32xf32>
    %cst_62 = arith.constant 1.000000e+00 : f32
    %455 = vector.broadcast %cst_62 : f32 to vector<2x32xf32>
    %456 = arith.addf %455, %454 : vector<2x32xf32>
    %457 = arith.divf %455, %456 : vector<2x32xf32>
    %458 = vector.extract_strided_slice %447 {offsets = [0, 32], sizes = [2, 32], strides = [1, 1]} : vector<2x96xf32> to vector<2x32xf32>
    %459 = vector.extract_strided_slice %444 {offsets = [0, 32], sizes = [2, 32], strides = [1, 1]} : vector<2x96xf32> to vector<2x32xf32>
    %460 = arith.addf %458, %459 : vector<2x32xf32>
    %461 = arith.negf %460 : vector<2x32xf32>
    %462 = math.exp %461 : vector<2x32xf32>
    %cst_63 = arith.constant 1.000000e+00 : f32
    %463 = vector.broadcast %cst_63 : f32 to vector<2x32xf32>
    %464 = arith.addf %463, %462 : vector<2x32xf32>
    %465 = arith.divf %463, %464 : vector<2x32xf32>
    %466 = vector.extract_strided_slice %447 {offsets = [0, 64], sizes = [2, 32], strides = [1, 1]} : vector<2x96xf32> to vector<2x32xf32>
    %467 = vector.extract_strided_slice %444 {offsets = [0, 64], sizes = [2, 32], strides = [1, 1]} : vector<2x96xf32> to vector<2x32xf32>
    %468 = arith.mulf %457, %467 : vector<2x32xf32>
    %469 = arith.addf %466, %468 : vector<2x32xf32>
    %470 = math.tanh %469 : vector<2x32xf32>
    %cst_64 = arith.constant 1.000000e+00 : f32
    %471 = vector.broadcast %cst_64 : f32 to vector<2x32xf32>
    %472 = arith.subf %471, %465 : vector<2x32xf32>
    %473 = arith.mulf %472, %470 : vector<2x32xf32>
    %474 = arith.mulf %465, %414 : vector<2x32xf32>
    %475 = arith.addf %473, %474 : vector<2x32xf32>
    %476 = vector.extract_strided_slice %449 {offsets = [0, 0], sizes = [2, 32], strides = [1, 1]} : vector<2x96xf32> to vector<2x32xf32>
    %477 = vector.extract_strided_slice %445 {offsets = [0, 0], sizes = [2, 32], strides = [1, 1]} : vector<2x96xf32> to vector<2x32xf32>
    %478 = arith.addf %476, %477 : vector<2x32xf32>
    %479 = arith.negf %478 : vector<2x32xf32>
    %480 = math.exp %479 : vector<2x32xf32>
    %cst_65 = arith.constant 1.000000e+00 : f32
    %481 = vector.broadcast %cst_65 : f32 to vector<2x32xf32>
    %482 = arith.addf %481, %480 : vector<2x32xf32>
    %483 = arith.divf %481, %482 : vector<2x32xf32>
    %484 = vector.extract_strided_slice %449 {offsets = [0, 32], sizes = [2, 32], strides = [1, 1]} : vector<2x96xf32> to vector<2x32xf32>
    %485 = vector.extract_strided_slice %445 {offsets = [0, 32], sizes = [2, 32], strides = [1, 1]} : vector<2x96xf32> to vector<2x32xf32>
    %486 = arith.addf %484, %485 : vector<2x32xf32>
    %487 = arith.negf %486 : vector<2x32xf32>
    %488 = math.exp %487 : vector<2x32xf32>
    %cst_66 = arith.constant 1.000000e+00 : f32
    %489 = vector.broadcast %cst_66 : f32 to vector<2x32xf32>
    %490 = arith.addf %489, %488 : vector<2x32xf32>
    %491 = arith.divf %489, %490 : vector<2x32xf32>
    %492 = vector.extract_strided_slice %449 {offsets = [0, 64], sizes = [2, 32], strides = [1, 1]} : vector<2x96xf32> to vector<2x32xf32>
    %493 = vector.extract_strided_slice %445 {offsets = [0, 64], sizes = [2, 32], strides = [1, 1]} : vector<2x96xf32> to vector<2x32xf32>
    %494 = arith.mulf %483, %493 : vector<2x32xf32>
    %495 = arith.addf %492, %494 : vector<2x32xf32>
    %496 = math.tanh %495 : vector<2x32xf32>
    %cst_67 = arith.constant 1.000000e+00 : f32
    %497 = vector.broadcast %cst_67 : f32 to vector<2x32xf32>
    %498 = arith.subf %497, %491 : vector<2x32xf32>
    %499 = arith.mulf %498, %496 : vector<2x32xf32>
    %500 = arith.mulf %491, %440 : vector<2x32xf32>
    %501 = arith.addf %499, %500 : vector<2x32xf32>
    %502 = tpu.concatenate %48, %501 in 1 : vector<2x32xf32>, vector<2x32xf32> -> vector<2x64xf32>
    %503 = tpu.concatenate %109, %440 in 1 : vector<2x32xf32>, vector<2x32xf32> -> vector<2x64xf32>
    %504 = tpu.concatenate %170, %379 in 1 : vector<2x32xf32>, vector<2x32xf32> -> vector<2x64xf32>
    %505 = tpu.concatenate %231, %318 in 1 : vector<2x32xf32>, vector<2x32xf32> -> vector<2x64xf32>
    %506 = tpu.concatenate %292, %257 in 1 : vector<2x32xf32>, vector<2x32xf32> -> vector<2x64xf32>
    %507 = tpu.concatenate %353, %196 in 1 : vector<2x32xf32>, vector<2x32xf32> -> vector<2x64xf32>
    %508 = tpu.concatenate %414, %135 in 1 : vector<2x32xf32>, vector<2x32xf32> -> vector<2x64xf32>
    %509 = tpu.concatenate %475, %74 in 1 : vector<2x32xf32>, vector<2x32xf32> -> vector<2x64xf32>
    %510 = vector.shape_cast %502 : vector<2x64xf32> to vector<1x2x64xf32>
    %511 = vector.shape_cast %503 : vector<2x64xf32> to vector<1x2x64xf32>
    %512 = vector.shape_cast %504 : vector<2x64xf32> to vector<1x2x64xf32>
    %513 = vector.shape_cast %505 : vector<2x64xf32> to vector<1x2x64xf32>
    %514 = vector.shape_cast %506 : vector<2x64xf32> to vector<1x2x64xf32>
    %515 = vector.shape_cast %507 : vector<2x64xf32> to vector<1x2x64xf32>
    %516 = vector.shape_cast %508 : vector<2x64xf32> to vector<1x2x64xf32>
    %517 = vector.shape_cast %509 : vector<2x64xf32> to vector<1x2x64xf32>
    %518 = tpu.concatenate %510, %511, %512, %513, %514, %515, %516, %517 in 0 : vector<1x2x64xf32>, vector<1x2x64xf32>, vector<1x2x64xf32>, vector<1x2x64xf32>, vector<1x2x64xf32>, vector<1x2x64xf32>, vector<1x2x64xf32>, vector<1x2x64xf32> -> vector<8x2x64xf32>
    %519 = vector.shape_cast %518 : vector<8x2x64xf32> to vector<16x64xf32>
    %c0_68 = arith.constant 0 : index
    %c0_69 = arith.constant 0 : index
    %520 = vector.load %arg5[%c0_68, %c0_69] : memref<64x64xf32, #tpu.memory_space<vmem>>, vector<64x64xf32>
    %cst_70 = arith.constant dense<0.000000e+00> : vector<16x64xf32>
    %521 = tpu.matmul %519, %520, %cst_70 {dimension_numbers = #tpu.dot_dimension_numbers<[1], [0], [0], [1], [0, 0, 1, 1], [], []>} : vector<16x64xf32>, vector<64x64xf32>, vector<16x64xf32> -> vector<16x64xf32>
    %c0_71 = arith.constant 0 : index
    %c0_72 = arith.constant 0 : index
    %522 = vector.load %arg6[%c0_71, %c0_72] : memref<1x64xf32, #tpu.memory_space<vmem>>, vector<1x64xf32>
    %523 = vector.broadcast %522 : vector<1x64xf32> to vector<16x64xf32>
    %524 = arith.addf %521, %523 : vector<16x64xf32>
    %525 = math.tanh %524 : vector<16x64xf32>
    %526 = vector.shape_cast %525 : vector<16x64xf32> to vector<8x2x64xf32>
    %c0_73 = arith.constant 0 : index
    %c0_74 = arith.constant 0 : index
    %527 = vector.load %arg7[%c0_73, %c0_74] : memref<1x64xf32, #tpu.memory_space<vmem>>, vector<1x64xf32>
    %528 = vector.shape_cast %527 : vector<1x64xf32> to vector<1x1x64xf32>
    %529 = vector.broadcast %528 : vector<1x1x64xf32> to vector<8x2x64xf32>
    %530 = arith.mulf %526, %529 : vector<8x2x64xf32>
    %cst_75 = arith.constant dense<0.000000e+00> : vector<8x2xf32>
    %531 = vector.multi_reduction <add>, %530, %cst_75 [2] : vector<8x2x64xf32> to vector<8x2xf32>
    %cst_76 = arith.constant dense<0xFF800000> : vector<8xf32>
    %532 = vector.multi_reduction <maximumf>, %531, %cst_76 [1] : vector<8x2xf32> to vector<8xf32>
    %533 = vector.shape_cast %532 : vector<8xf32> to vector<8x1xf32>
    %534 = vector.broadcast %533 : vector<8x1xf32> to vector<8x2xf32>
    %535 = arith.subf %531, %534 : vector<8x2xf32>
    %536 = math.exp %535 : vector<8x2xf32>
    %cst_77 = arith.constant dense<0.000000e+00> : vector<8xf32>
    %537 = vector.multi_reduction <add>, %536, %cst_77 [1] : vector<8x2xf32> to vector<8xf32>
    %538 = vector.shape_cast %537 : vector<8xf32> to vector<8x1xf32>
    %539 = vector.broadcast %538 : vector<8x1xf32> to vector<8x2xf32>
    %540 = arith.divf %536, %539 : vector<8x2xf32>
    %541 = vector.shape_cast %540 : vector<8x2xf32> to vector<8x2x1xf32>
    %542 = vector.broadcast %541 : vector<8x2x1xf32> to vector<8x2x64xf32>
    %543 = arith.mulf %542, %518 : vector<8x2x64xf32>
    %cst_78 = arith.constant dense<0.000000e+00> : vector<8x64xf32>
    %544 = vector.multi_reduction <add>, %543, %cst_78 [1] : vector<8x2x64xf32> to vector<8x64xf32>
    %c0_79 = arith.constant 0 : index
    %c0_80 = arith.constant 0 : index
    %545 = vector.load %arg8[%c0_79, %c0_80] : memref<8x64xf32, #tpu.memory_space<vmem>>, vector<8x64xf32>
    tpu.vector_store %arg8[%c0_79, %c0_80], %544 {strides = array<i32>} : memref<8x64xf32, #tpu.memory_space<vmem>>, vector<8x64xf32>,
    return
  }
}

</mosaic_0001>

<llo_original>
// kernel: sent2vec_forward.1
$region0: #{sent2vec_forward.1}
  #allocation0 [shape = 'u32[]', space=smem, size = 0x4, offset = 0x4, fixed_abs, tag = 'smem constant byte address 0x4 - core index']
  #allocation1 [shape = 'u32[144,128]{1,0:T(1,128)}', space=vmem, size = 0x12000, scoped, tag = 'internal scratch']
  %s0 = inlined_call_operand.hbm [shape: f32[8,2,32], index: 0, kind: input, shape index: {}]
  %s1 = inlined_call_operand.hbm [shape: f32[32,192], index: 1, kind: input, shape index: {}]
  %s2 = inlined_call_operand.vmem [shape: f32[1,192], index: 2, kind: input, shape index: {}]
  %s3 = inlined_call_operand.hbm [shape: f32[64,192], index: 3, kind: input, shape index: {}]
  %s4 = inlined_call_operand.hbm [shape: f32[1,192], index: 4, kind: input, shape index: {}]
  %s5 = inlined_call_operand.hbm [shape: f32[64,64], index: 5, kind: input, shape index: {}]
  %s6 = inlined_call_operand.vmem [shape: f32[1,64], index: 6, kind: input, shape index: {}]
  %s7 = inlined_call_operand.vmem [shape: f32[1,64], index: 7, kind: input, shape index: {}]
  %s8 = inlined_call_operand.hbm [shape: f32[8,64], index: 8, kind: output, shape index: {}]
  %s9 = sld [smem:[#allocation0]]
  $region62: #{sent2vec_forward.1} parent=0
    _
  %s11 = ssub.s32 1, %s9
  %s12 = scalar_select 0, %s11, %s9
  $region1: #{sent2vec_forward.1} parent=0
    #allocation2 [shape = 'u8[8192]{0}', space=vmem, size = 0x2000, scoped, tag = 'input window, operand 0, single buffered']
    #allocation3 [shape = 's32[1]{0}', space=sflag, size = 0x4, scoped, tag = 'scoped memory for sent2vec_forward.1']
    #allocation4 [shape = 's32[1]{0}', space=sflag, size = 0x4, scoped, tag = 'scoped memory for sent2vec_forward.1']
    #allocation5 [shape = 'u8[32768]{0}', space=vmem, size = 0x8000, scoped, tag = 'input window, operand 1, single buffered']
    #allocation6 [shape = 's32[1]{0}', space=sflag, size = 0x4, scoped, tag = 'scoped memory for sent2vec_forward.1']
    #allocation7 [shape = 'u8[65536]{0}', space=vmem, size = 0x10000, scoped, tag = 'input window, operand 3, single buffered']
    #allocation8 [shape = 'u8[1024]{0}', space=vmem, size = 0x400, scoped, tag = 'input window, operand 4, single buffered']
    #allocation9 [shape = 's32[1]{0}', space=sflag, size = 0x4, scoped, tag = 'scoped memory for sent2vec_forward.1']
    #allocation10 [shape = 'u8[32768]{0}', space=vmem, size = 0x8000, scoped, tag = 'input window, operand 5, single buffered']
    #allocation11 [shape = 'u8[4096]{0}', space=vmem, size = 0x1000, scoped, tag = 'output window, operand 0, single buffered']
    %13 = vsyncpa [#allocation3], 0
    %14 = vsyncpa [#allocation6], 0
    %15 = vsyncpa [#allocation9], 0
    %16 = vsyncpa [#allocation4], 0
    // Predicated region
    $region2: #{sent2vec_forward.1} parent=1 // pred_check
      _
    $region3: #{sent2vec_forward.1} parent=1 // pred_check_branch
      %18 = sbr.rel (0) target = $region5
    $region4: #{sent2vec_forward.1} parent=1 // pred_region
      %s20 = ssub.s32 256, 256
      %21 = vsyncadd [#allocation3], %s20
      %s22 = sshll.u32 [#allocation2], 4
      %s23 = int_to_ptr.vmem [resolvable:$true] %s22
      %28 = dma.hbm_to_vmem [thread:$0]  %s0, 256, %s23, [#allocation3], 32, 32, 2
    $region5: #{sent2vec_forward.1} parent=1 // pred_fallthru
      _
    // Predicated region
    $region6: #{sent2vec_forward.1} parent=1 // pred_check
      _
    $region7: #{sent2vec_forward.1} parent=1 // pred_check_branch
      %30 = sbr.rel (0) target = $region9
    $region8: #{sent2vec_forward.1} parent=1 // pred_region
      %s32 = ssub.s32 1024, 1024
      %33 = vsyncadd [#allocation6], %s32
      %s34 = sshll.u32 [#allocation5], 4
      %s35 = int_to_ptr.vmem [resolvable:$true] %s34
      %40 = dma.hbm_to_vmem [thread:$0]  %s1, 1024, %s35, [#allocation6], 256, 256, 16
    $region9: #{sent2vec_forward.1} parent=1 // pred_fallthru
      _
    // Predicated region
    $region10: #{sent2vec_forward.1} parent=1 // pred_check
      _
    $region11: #{sent2vec_forward.1} parent=1 // pred_check_branch
      %42 = sbr.rel (0) target = $region13
    $region12: #{sent2vec_forward.1} parent=1 // pred_region
      _
    $region13: #{sent2vec_forward.1} parent=1 // pred_fallthru
      _
    // Predicated region
    $region14: #{sent2vec_forward.1} parent=1 // pred_check
      _
    $region15: #{sent2vec_forward.1} parent=1 // pred_check_branch
      %44 = sbr.rel (0) target = $region17
    $region16: #{sent2vec_forward.1} parent=1 // pred_region
      %s46 = ssub.s32 2048, 2048
      %47 = vsyncadd [#allocation6], %s46
      %s48 = sshll.u32 [#allocation7], 4
      %s49 = int_to_ptr.vmem [resolvable:$true] %s48
      %54 = dma.hbm_to_vmem [thread:$0]  %s3, 2048, %s49, [#allocation6], 256, 256, 16
    $region17: #{sent2vec_forward.1} parent=1 // pred_fallthru
      _
    // Predicated region
    $region18: #{sent2vec_forward.1} parent=1 // pred_check
      _
    $region19: #{sent2vec_forward.1} parent=1 // pred_check_branch
      %56 = sbr.rel (0) target = $region21
    $region20: #{sent2vec_forward.1} parent=1 // pred_region
      %s58 = ssub.s32 32, 32
      %59 = vsyncadd [#allocation9], %s58
      %s61 = sshll.u32 [#allocation8], 4
      %s62 = int_to_ptr.vmem [resolvable:$true] %s61
      %64 = dma.hbm_to_vmem [thread:$0]  %s4, 32, %s62, [#allocation9]
    $region21: #{sent2vec_forward.1} parent=1 // pred_fallthru
      _
    // Predicated region
    $region22: #{sent2vec_forward.1} parent=1 // pred_check
      _
    $region23: #{sent2vec_forward.1} parent=1 // pred_check_branch
      %66 = sbr.rel (0) target = $region25
    $region24: #{sent2vec_forward.1} parent=1 // pred_region
      %s68 = ssub.s32 1024, 1024
      %69 = vsyncadd [#allocation9], %s68
      %s70 = sshll.u32 [#allocation10], 4
      %s71 = int_to_ptr.vmem [resolvable:$true] %s70
      %76 = dma.hbm_to_vmem [thread:$0]  %s5, 1024, %s71, [#allocation9], 128, 128, 8
    $region25: #{sent2vec_forward.1} parent=1 // pred_fallthru
      _
    // Predicated region
    $region26: #{sent2vec_forward.1} parent=1 // pred_check
      _
    $region27: #{sent2vec_forward.1} parent=1 // pred_check_branch
      %78 = sbr.rel (0) target = $region29
    $region28: #{sent2vec_forward.1} parent=1 // pred_region
      _
    $region29: #{sent2vec_forward.1} parent=1 // pred_fallthru
      _
    // Predicated region
    $region30: #{sent2vec_forward.1} parent=1 // pred_check
      _
    $region31: #{sent2vec_forward.1} parent=1 // pred_check_branch
      %80 = sbr.rel (0) target = $region33
    $region32: #{sent2vec_forward.1} parent=1 // pred_region
      _
    $region33: #{sent2vec_forward.1} parent=1 // pred_fallthru
      _
    // Predicated region
    $region34: #{sent2vec_forward.1} parent=1 // pred_check
      _
    $region35: #{sent2vec_forward.1} parent=1 // pred_check_branch
      %82 = sbr.rel (0) target = $region37
    $region36: #{sent2vec_forward.1} parent=1 // pred_region
      %83 = dma.done [#allocation3], 256
    $region37: #{sent2vec_forward.1} parent=1 // pred_fallthru
      _
    // Predicated region
    $region38: #{sent2vec_forward.1} parent=1 // pred_check
      _
    $region39: #{sent2vec_forward.1} parent=1 // pred_check_branch
      %85 = sbr.rel (0) target = $region41
    $region40: #{sent2vec_forward.1} parent=1 // pred_region
      %86 = dma.done [#allocation6], 1024
    $region41: #{sent2vec_forward.1} parent=1 // pred_fallthru
      _
    // Predicated region
    $region42: #{sent2vec_forward.1} parent=1 // pred_check
      _
    $region43: #{sent2vec_forward.1} parent=1 // pred_check_branch
      %88 = sbr.rel (0) target = $region45
    $region44: #{sent2vec_forward.1} parent=1 // pred_region
      %89 = dma.done [#allocation6], 2048
    $region45: #{sent2vec_forward.1} parent=1 // pred_fallthru
      _
    // Predicated region
    $region46: #{sent2vec_forward.1} parent=1 // pred_check
      _
    $region47: #{sent2vec_forward.1} parent=1 // pred_check_branch
      %91 = sbr.rel (0) target = $region49
    $region48: #{sent2vec_forward.1} parent=1 // pred_region
      %92 = dma.done [#allocation9], 32
    $region49: #{sent2vec_forward.1} parent=1 // pred_fallthru
      _
    // Predicated region
    $region50: #{sent2vec_forward.1} parent=1 // pred_check
      _
    $region51: #{sent2vec_forward.1} parent=1 // pred_check_branch
      %94 = sbr.rel (0) target = $region53
    $region52: #{sent2vec_forward.1} parent=1 // pred_region
      %95 = dma.done [#allocation9], 1024
    $region53: #{sent2vec_forward.1} parent=1 // pred_fallthru
      _
    %v96 = vld [vmem:[#allocation2] sm:$0x3]
    %v97 = vld [vmem:[#allocation2 + $0x2] sm:$0x3]
    %v98 = vld [vmem:[#allocation2 + $0x4] sm:$0x3]
    %v99 = vld [vmem:[#allocation2 + $0x6] sm:$0x3]
    %v100 = vld [vmem:[#allocation2 + $0x8] sm:$0x3]
    %v101 = vld [vmem:[#allocation2 + $0xa] sm:$0x3]
    %v102 = vld [vmem:[#allocation2 + $0xc] sm:$0x3]
    %v103 = vld [vmem:[#allocation2 + $0xe] sm:$0x3]
    %v104 = vld [vmem:[#allocation5] sm:$0xff]
    %v105 = vld [vmem:[#allocation5 + $0x8] sm:$0xff]
    %v106 = vld [vmem:[#allocation5 + $0x10] sm:$0xff]
    %v107 = vld [vmem:[#allocation5 + $0x18] sm:$0xff]
    %v108 = vld [vmem:[#allocation5 + $0x20] sm:$0xff]
    %v109 = vld [vmem:[#allocation5 + $0x28] sm:$0xff]
    %v110 = vld [vmem:[#allocation5 + $0x30] sm:$0xff]
    %v111 = vld [vmem:[#allocation5 + $0x38] sm:$0xff]
    %v112 = vld [vmem:[%s2] sm:$0x3]
    %v114 = vlaneseq
    %v115 = vshrl.u32 %v114, 7
    %v116 = vsub.s32 0, %v115
    %v117 = vrot.slane %v112, %v116
    %v118 = vlaneseq
    %v119 = vshrl.u32 %v118, 7
    %v120 = vsub.s32 1, %v119
    %v121 = vrot.slane %v112, %v120
    %v132 = vcombine.low %v96, %v97
    %v133 = vcombine.low %v98, %v99
    %v135 = vunpack.c.l.s4 1983009808
    %v136 = vunpack.c.0.s8 %v135
    %v137 = vlaneseq
    %v138 = vshrl.u32 %v137, 7
    %v139 = vsub.s32 %v136, %v138
    %v140 = vrot.slane %v132, %v139
    %v142 = vunpack.c.l.s4 1983009808
    %v143 = vunpack.c.0.s8 %v142
    %v144 = vlaneseq
    %v145 = vshrl.u32 %v144, 7
    %v146 = vsub.s32 %v143, %v145
    %v147 = vrot.slane %v133, %v146
    %v148 = vcombine.low %v140, %v147
    %v149 = vcombine.low %v100, %v101
    %v150 = vcombine.low %v102, %v103
    %v152 = vunpack.c.l.s4 1983009808
    %v153 = vunpack.c.0.s8 %v152
    %v154 = vlaneseq
    %v155 = vshrl.u32 %v154, 7
    %v156 = vsub.s32 %v153, %v155
    %v157 = vrot.slane %v149, %v156
    %v159 = vunpack.c.l.s4 1983009808
    %v160 = vunpack.c.0.s8 %v159
    %v161 = vlaneseq
    %v162 = vshrl.u32 %v161, 7
    %v163 = vsub.s32 %v160, %v162
    %v164 = vrot.slane %v150, %v163
    %v165 = vcombine.low %v157, %v164
    %vm166 = vcmask 261120
    %v167 = vsel %vm166, %v148, 0
    %v169 = vsel %vm166, %v165, 0
    %171 = vmatprep.subr.mxu0 0.0
    %172 = vmatpush1.msra.mxu0 0.0
    %173 = vmatprep.subr.mxu0 0.0
    %174 = vmatpush1.msra.mxu0 0.0
    %175 = vmatprep.subr.mxu0 0.0
    %176 = vmatpush1.msra.mxu0 0.0
    %177 = vmatprep.subr.mxu0 0.0
    %178 = vmatpush1.msra.mxu0 0.0
    %179 = vmatprep.subr.mxu0 0.0
    %180 = vmatpush1.msra.mxu0 0.0
    %181 = vmatprep.subr.mxu0 0.0
    %182 = vmatpush1.msra.mxu0 0.0
    %183 = vmatprep.subr.mxu0 0.0
    %184 = vmatpush1.msra.mxu0 0.0
    %185 = vmatprep.subr.mxu0 0.0
    %186 = vmatpush1.msra.mxu0 0.0
    %187 = vmatprep.subr.mxu0 0.0
    %188 = vmatpush1.msra.mxu0 0.0
    %189 = vmatprep.subr.mxu0 0.0
    %190 = vmatpush1.msra.mxu0 0.0
    %191 = vmatprep.subr.mxu0 0.0
    %192 = vmatpush1.msra.mxu0 0.0
    %193 = vmatprep.subr.mxu0 0.0
    %194 = vmatpush1.msra.mxu0 0.0
    %195 = vmatprep.subr.mxu0 %v111
    %196 = vmatpush1.msra.mxu0 %v110
    %197 = vmatprep.subr.mxu0 %v109
    %198 = vmatpush1.msra.mxu0 %v108
    %199 = vmatprep.subr.mxu0 %v107
    %200 = vmatpush1.msra.mxu0 %v106
    %201 = vmatprep.subr.mxu0 %v105
    %202 = vmatpush1.msra.mxu0 %v104
    %203 = vmatprep.subr.mxu0 0.0
    %204 = vmatpush2.msra.mxu0 0.0
    %205 = vmatprep.subr.mxu0 0.0
    %206 = vmatpush2.msra.mxu0 0.0
    %207 = vmatprep.subr.mxu0 0.0
    %208 = vmatpush2.msra.mxu0 0.0
    %209 = vmatprep.subr.mxu0 0.0
    %210 = vmatpush2.msra.mxu0 0.0
    %211 = vmatprep.subr.mxu0 0.0
    %212 = vmatpush2.msra.mxu0 0.0
    %213 = vmatprep.subr.mxu0 0.0
    %214 = vmatpush2.msra.mxu0 0.0
    %215 = vmatprep.subr.mxu0 0.0
    %216 = vmatpush2.msra.mxu0 0.0
    %217 = vmatprep.subr.mxu0 0.0
    %218 = vmatpush2.msra.mxu0 0.0
    %219 = vmatprep.subr.mxu0 0.0
    %220 = vmatpush2.msra.mxu0 0.0
    %221 = vmatprep.subr.mxu0 0.0
    %222 = vmatpush2.msra.mxu0 0.0
    %223 = vmatprep.subr.mxu0 0.0
    %224 = vmatpush2.msra.mxu0 0.0
    %225 = vmatprep.subr.mxu0 0.0
    %226 = vmatpush2.msra.mxu0 0.0
    %227 = vmatprep.subr.mxu0 0.0
    %228 = vmatpush2.msra.mxu0 0.0
    %229 = vmatprep.subr.mxu0 0.0
    %230 = vmatpush2.msra.mxu0 0.0
    %231 = vmatprep.subr.mxu0 0.0
    %232 = vmatpush2.msra.mxu0 0.0
    %233 = vmatprep.subr.mxu0 0.0
    %234 = vmatpush2.msra.mxu0 0.0
    %235 = vmatprep.mubr.f32.mxu0 0.0
    %236 = vmatmul.mubr.f32.gmra.mxu0 %v167
    %v237 = vpop.f32.mrf.mxu0
    %v238 = vadd.f32 %v117, %v237
    %v239 = vpop.f32.mrf.mxu0
    %v240 = vadd.f32 %v121, %v239
    %241 = vmatprep.mubr.f32.mxu0 0.0
    %242 = vmatmul.mubr.f32.gmra.mxu0 %v169
    %v243 = vpop.f32.mrf.mxu0
    %v244 = vadd.f32 %v117, %v243
    %v245 = vpop.f32.mrf.mxu0
    %v246 = vadd.f32 %v121, %v245
    %247 = vdwg.mxu0
    %v252 = vcombine.low %v238, %v240
    %v253 = vcombine.high %v238, %v240
    %v255 = vunpack.c.l.s4 1983009808
    %v256 = vunpack.c.0.s8 %v255
    %v257 = vlaneseq
    %v258 = vshrl.u32 %v257, 7
    %v259 = vsub.s32 %v256, %v258
    %v260 = vrot.slane %v252, %v259
    %v262 = vunpack.c.l.s4 1983009808
    %v263 = vunpack.c.0.s8 %v262
    %v264 = vlaneseq
    %v265 = vshrl.u32 %v264, 7
    %v266 = vsub.s32 %v263, %v265
    %v267 = vrot.slane %v253, %v266
    %v268 = vcombine.high %v260, %v260
    %v269 = vcombine.high %v267, %v267
    %v270 = vcombine.low %v244, %v246
    %v271 = vcombine.high %v244, %v246
    %v273 = vunpack.c.l.s4 1983009808
    %v274 = vunpack.c.0.s8 %v273
    %v275 = vlaneseq
    %v276 = vshrl.u32 %v275, 7
    %v277 = vsub.s32 %v274, %v276
    %v278 = vrot.slane %v270, %v277
    %v280 = vunpack.c.l.s4 1983009808
    %v281 = vunpack.c.0.s8 %v280
    %v282 = vlaneseq
    %v283 = vshrl.u32 %v282, 7
    %v284 = vsub.s32 %v281, %v283
    %v285 = vrot.slane %v271, %v284
    %v286 = vcombine.high %v278, %v278
    %v287 = vcombine.high %v285, %v285
    %v296 = vld [vmem:[#allocation7] sm:$0xff]
    %v297 = vld [vmem:[#allocation7 + $0x8] sm:$0xff]
    %v298 = vld [vmem:[#allocation7 + $0x10] sm:$0xff]
    %v299 = vld [vmem:[#allocation7 + $0x18] sm:$0xff]
    %v300 = vld [vmem:[#allocation7 + $0x20] sm:$0xff]
    %v301 = vld [vmem:[#allocation7 + $0x28] sm:$0xff]
    %v302 = vld [vmem:[#allocation7 + $0x30] sm:$0xff]
    %v303 = vld [vmem:[#allocation7 + $0x38] sm:$0xff]
    %v304 = vld [vmem:[#allocation7 + $0x40] sm:$0xff]
    %v305 = vld [vmem:[#allocation7 + $0x48] sm:$0xff]
    %v306 = vld [vmem:[#allocation7 + $0x50] sm:$0xff]
    %v307 = vld [vmem:[#allocation7 + $0x58] sm:$0xff]
    %v308 = vld [vmem:[#allocation7 + $0x60] sm:$0xff]
    %v309 = vld [vmem:[#allocation7 + $0x68] sm:$0xff]
    %v310 = vld [vmem:[#allocation7 + $0x70] sm:$0xff]
    %v311 = vld [vmem:[#allocation7 + $0x78] sm:$0xff]
    %v312 = vld [vmem:[#allocation8] sm:$0x3]
    %v314 = vlaneseq
    %v315 = vshrl.u32 %v314, 7
    %v316 = vsub.s32 0, %v315
    %v317 = vrot.slane %v312, %v316
    %v318 = vlaneseq
    %v319 = vshrl.u32 %v318, 7
    %v320 = vsub.s32 1, %v319
    %v321 = vrot.slane %v312, %v320
    %vm324 = vcmask 523264
    %v326 = vsel %vm324, 0.0, 0
    %328 = vmatprep.subr.mxu0 0.0
    %329 = vmatpush1.msra.mxu0 0.0
    %330 = vmatprep.subr.mxu0 0.0
    %331 = vmatpush1.msra.mxu0 0.0
    %332 = vmatprep.subr.mxu0 0.0
    %333 = vmatpush1.msra.mxu0 0.0
    %334 = vmatprep.subr.mxu0 0.0
    %335 = vmatpush1.msra.mxu0 0.0
    %336 = vmatprep.subr.mxu0 0.0
    %337 = vmatpush1.msra.mxu0 0.0
    %338 = vmatprep.subr.mxu0 0.0
    %339 = vmatpush1.msra.mxu0 0.0
    %340 = vmatprep.subr.mxu0 0.0
    %341 = vmatpush1.msra.mxu0 0.0
    %342 = vmatprep.subr.mxu0 0.0
    %343 = vmatpush1.msra.mxu0 0.0
    %344 = vmatprep.subr.mxu0 %v311
    %345 = vmatpush1.msra.mxu0 %v310
    %346 = vmatprep.subr.mxu0 %v309
    %347 = vmatpush1.msra.mxu0 %v308
    %348 = vmatprep.subr.mxu0 %v307
    %349 = vmatpush1.msra.mxu0 %v306
    %350 = vmatprep.subr.mxu0 %v305
    %351 = vmatpush1.msra.mxu0 %v304
    %352 = vmatprep.subr.mxu0 %v303
    %353 = vmatpush1.msra.mxu0 %v302
    %354 = vmatprep.subr.mxu0 %v301
    %355 = vmatpush1.msra.mxu0 %v300
    %356 = vmatprep.subr.mxu0 %v299
    %357 = vmatpush1.msra.mxu0 %v298
    %358 = vmatprep.subr.mxu0 %v297
    %359 = vmatpush1.msra.mxu0 %v296
    %360 = vmatprep.subr.mxu0 0.0
    %361 = vmatpush2.msra.mxu0 0.0
    %362 = vmatprep.subr.mxu0 0.0
    %363 = vmatpush2.msra.mxu0 0.0
    %364 = vmatprep.subr.mxu0 0.0
    %365 = vmatpush2.msra.mxu0 0.0
    %366 = vmatprep.subr.mxu0 0.0
    %367 = vmatpush2.msra.mxu0 0.0
    %368 = vmatprep.subr.mxu0 0.0
    %369 = vmatpush2.msra.mxu0 0.0
    %370 = vmatprep.subr.mxu0 0.0
    %371 = vmatpush2.msra.mxu0 0.0
    %372 = vmatprep.subr.mxu0 0.0
    %373 = vmatpush2.msra.mxu0 0.0
    %374 = vmatprep.subr.mxu0 0.0
    %375 = vmatpush2.msra.mxu0 0.0
    %376 = vmatprep.subr.mxu0 0.0
    %377 = vmatpush2.msra.mxu0 0.0
    %378 = vmatprep.subr.mxu0 0.0
    %379 = vmatpush2.msra.mxu0 0.0
    %380 = vmatprep.subr.mxu0 0.0
    %381 = vmatpush2.msra.mxu0 0.0
    %382 = vmatprep.subr.mxu0 0.0
    %383 = vmatpush2.msra.mxu0 0.0
    %384 = vmatprep.subr.mxu0 0.0
    %385 = vmatpush2.msra.mxu0 0.0
    %386 = vmatprep.subr.mxu0 0.0
    %387 = vmatpush2.msra.mxu0 0.0
    %388 = vmatprep.subr.mxu0 0.0
    %389 = vmatpush2.msra.mxu0 0.0
    %390 = vmatprep.subr.mxu0 0.0
    %391 = vmatpush2.msra.mxu0 0.0
    %392 = vmatprep.mubr.f32.mxu0 0.0
    %393 = vmatmul.mubr.f32.gmra.mxu0 %v326
    %v394 = vpop.f32.mrf.mxu0
    %v395 = vadd.f32 %v317, %v394
    %v396 = vpop.f32.mrf.mxu0
    %v397 = vadd.f32 %v321, %v396
    %398 = vdwg.mxu0
    %v399 = vadd.f32 %v260, %v395
    %v400 = vxor.u32 %v399, 2147483648
    %v401 = vmul.f32 %v400, 1.442695
    %v402 = vpow.pop %v401
    %v403 = vadd.f32 %v402, 1.0
    %v404 = vrcp.pop %v403
    %v405 = vmul.f32 1.0, %v404
    %v408 = vunpack.c.l.s4 1983009808
    %v409 = vunpack.c.0.s8 %v408
    %v410 = vlaneseq
    %v411 = vshrl.u32 %v410, 7
    %v412 = vsub.s32 %v409, %v411
    %v413 = vrot.slane %v395, %v412
    %414 = vrot.lane.b32.xlu0 %v413, 64
    %v415 = vpop.permute.xlu0 %414
    %v417 = vmul.f32 %v405, %v415
    %419 = vrot.lane.b32.xlu0 %v417, 64
    %v420 = vpop.permute.xlu0 %419
    %v422 = vadd.f32 %v260, %v420
    %v423 = vtanh.pop %v422
    %v424 = vsub.f32 1.0, %v405
    %426 = vrot.lane.b32.xlu0 %v423, 96
    %v427 = vpop.permute.xlu0 %426
    %v429 = vmul.f32 %v424, %v427
    %v430 = vmul.f32 %v405, 0.0
    %v431 = vadd.f32 %v429, %v430
    %v432 = vadd.f32 %v287, %v395
    %v433 = vxor.u32 %v432, 2147483648
    %v434 = vmul.f32 %v433, 1.442695
    %v435 = vpow.pop %v434
    %v436 = vadd.f32 %v435, 1.0
    %v437 = vrcp.pop %v436
    %v438 = vmul.f32 1.0, %v437
    %v439 = vrot.slane %v287, 2
    %v441 = vadd.f32 %v439, %v397
    %v442 = vxor.u32 %v441, 2147483648
    %v443 = vmul.f32 %v442, 1.442695
    %v444 = vpow.pop %v443
    %v445 = vadd.f32 %v444, 1.0
    %v446 = vrcp.pop %v445
    %v447 = vmul.f32 1.0, %v446
    %v450 = vunpack.c.l.s4 1983009808
    %v451 = vunpack.c.0.s8 %v450
    %v452 = vlaneseq
    %v453 = vshrl.u32 %v452, 7
    %v454 = vsub.s32 %v451, %v453
    %v455 = vrot.slane %v397, %v454
    %456 = vrot.lane.b32.xlu0 %v455, 64
    %v457 = vpop.permute.xlu0 %456
    %v459 = vmul.f32 %v438, %v457
    %460 = vrot.lane.b32.xlu0 %v287, 96
    %v461 = vpop.permute.xlu0 %460
    %v462 = vrot.slane %v461, 2
    %465 = vrot.lane.b32.xlu0 %v459, 32
    %v466 = vpop.permute.xlu0 %465
    %v468 = vadd.f32 %v462, %v466
    %v469 = vtanh.pop %v468
    %v470 = vsub.f32 1.0, %v447
    %v471 = vmul.f32 %v470, %v469
    %v472 = vmul.f32 %v447, 0.0
    %v473 = vadd.f32 %v471, %v472
    %v476 = vunpack.c.l.s4 1983009808
    %v477 = vunpack.c.0.s8 %v476
    %v478 = vlaneseq
    %v479 = vshrl.u32 %v478, 7
    %v480 = vsub.s32 %v477, %v479
    %v481 = vrot.slane %v431, %v480
    %482 = vrot.lane.b32.xlu0 %v481, 96
    %v483 = vpop.permute.xlu0 %482
    %v487 = vunpack.c.l.s4 1983009808
    %v488 = vunpack.c.0.s8 %v487
    %v489 = vlaneseq
    %v490 = vshrl.u32 %v489, 7
    %v491 = vsub.s32 %v488, %v490
    %v492 = vrot.slane %v473, %v491
    %493 = vrot.lane.b32.xlu0 %v492, 32
    %v494 = vpop.permute.xlu0 %493
    %v496 = vsel %vm166, %v483, %v494
    %v498 = vsel %vm324, %v496, 0
    %500 = vmatprep.subr.mxu0 0.0
    %501 = vmatpush1.msra.mxu0 0.0
    %502 = vmatprep.subr.mxu0 0.0
    %503 = vmatpush1.msra.mxu0 0.0
    %504 = vmatprep.subr.mxu0 0.0
    %505 = vmatpush1.msra.mxu0 0.0
    %506 = vmatprep.subr.mxu0 0.0
    %507 = vmatpush1.msra.mxu0 0.0
    %508 = vmatprep.subr.mxu0 0.0
    %509 = vmatpush1.msra.mxu0 0.0
    %510 = vmatprep.subr.mxu0 0.0
    %511 = vmatpush1.msra.mxu0 0.0
    %512 = vmatprep.subr.mxu0 0.0
    %513 = vmatpush1.msra.mxu0 0.0
    %514 = vmatprep.subr.mxu0 0.0
    %515 = vmatpush1.msra.mxu0 0.0
    %516 = vmatprep.subr.mxu0 %v311
    %517 = vmatpush1.msra.mxu0 %v310
    %518 = vmatprep.subr.mxu0 %v309
    %519 = vmatpush1.msra.mxu0 %v308
    %520 = vmatprep.subr.mxu0 %v307
    %521 = vmatpush1.msra.mxu0 %v306
    %522 = vmatprep.subr.mxu0 %v305
    %523 = vmatpush1.msra.mxu0 %v304
    %524 = vmatprep.subr.mxu0 %v303
    %525 = vmatpush1.msra.mxu0 %v302
    %526 = vmatprep.subr.mxu0 %v301
    %527 = vmatpush1.msra.mxu0 %v300
    %528 = vmatprep.subr.mxu0 %v299
    %529 = vmatpush1.msra.mxu0 %v298
    %530 = vmatprep.subr.mxu0 %v297
    %531 = vmatpush1.msra.mxu0 %v296
    %532 = vmatprep.subr.mxu0 0.0
    %533 = vmatpush2.msra.mxu0 0.0
    %534 = vmatprep.subr.mxu0 0.0
    %535 = vmatpush2.msra.mxu0 0.0
    %536 = vmatprep.subr.mxu0 0.0
    %537 = vmatpush2.msra.mxu0 0.0
    %538 = vmatprep.subr.mxu0 0.0
    %539 = vmatpush2.msra.mxu0 0.0
    %540 = vmatprep.subr.mxu0 0.0
    %541 = vmatpush2.msra.mxu0 0.0
    %542 = vmatprep.subr.mxu0 0.0
    %543 = vmatpush2.msra.mxu0 0.0
    %544 = vmatprep.subr.mxu0 0.0
    %545 = vmatpush2.msra.mxu0 0.0
    %546 = vmatprep.subr.mxu0 0.0
    %547 = vmatpush2.msra.mxu0 0.0
    %548 = vmatprep.subr.mxu0 0.0
    %549 = vmatpush2.msra.mxu0 0.0
    %550 = vmatprep.subr.mxu0 0.0
    %551 = vmatpush2.msra.mxu0 0.0
    %552 = vmatprep.subr.mxu0 0.0
    %553 = vmatpush2.msra.mxu0 0.0
    %554 = vmatprep.subr.mxu0 0.0
    %555 = vmatpush2.msra.mxu0 0.0
    %556 = vmatprep.subr.mxu0 0.0
    %557 = vmatpush2.msra.mxu0 0.0
    %558 = vmatprep.subr.mxu0 0.0
    %559 = vmatpush2.msra.mxu0 0.0
    %560 = vmatprep.subr.mxu0 0.0
    %561 = vmatpush2.msra.mxu0 0.0
    %562 = vmatprep.subr.mxu0 0.0
    %563 = vmatpush2.msra.mxu0 0.0
    %564 = vmatprep.mubr.f32.mxu0 0.0
    %565 = vmatmul.mubr.f32.gmra.mxu0 %v498
    %v566 = vpop.f32.mrf.mxu0
    %v567 = vadd.f32 %v317, %v566
    %v568 = vpop.f32.mrf.mxu0
    %v569 = vadd.f32 %v321, %v568
    %570 = vdwg.mxu0
    %v571 = vadd.f32 %v268, %v567
    %v572 = vxor.u32 %v571, 2147483648
    %v573 = vmul.f32 %v572, 1.442695
    %v574 = vpow.pop %v573
    %v575 = vadd.f32 %v574, 1.0
    %v576 = vrcp.pop %v575
    %v577 = vmul.f32 1.0, %v576
    %v580 = vunpack.c.l.s4 1983009808
    %v581 = vunpack.c.0.s8 %v580
    %v582 = vlaneseq
    %v583 = vshrl.u32 %v582, 7
    %v584 = vsub.s32 %v581, %v583
    %v585 = vrot.slane %v567, %v584
    %586 = vrot.lane.b32.xlu0 %v585, 64
    %v587 = vpop.permute.xlu0 %586
    %v589 = vmul.f32 %v577, %v587
    %591 = vrot.lane.b32.xlu0 %v589, 64
    %v592 = vpop.permute.xlu0 %591
    %v594 = vadd.f32 %v268, %v592
    %v595 = vtanh.pop %v594
    %v596 = vsub.f32 1.0, %v577
    %598 = vrot.lane.b32.xlu0 %v595, 96
    %v599 = vpop.permute.xlu0 %598
    %v601 = vmul.f32 %v596, %v599
    %v602 = vmul.f32 %v577, %v431
    %v603 = vadd.f32 %v601, %v602
    %v604 = vadd.f32 %v285, %v567
    %v605 = vxor.u32 %v604, 2147483648
    %v606 = vmul.f32 %v605, 1.442695
    %v607 = vpow.pop %v606
    %v608 = vadd.f32 %v607, 1.0
    %v609 = vrcp.pop %v608
    %v610 = vmul.f32 1.0, %v609
    %v611 = vrot.slane %v285, 2
    %v613 = vadd.f32 %v611, %v569
    %v614 = vxor.u32 %v613, 2147483648
    %v615 = vmul.f32 %v614, 1.442695
    %v616 = vpow.pop %v615
    %v617 = vadd.f32 %v616, 1.0
    %v618 = vrcp.pop %v617
    %v619 = vmul.f32 1.0, %v618
    %v622 = vunpack.c.l.s4 1983009808
    %v623 = vunpack.c.0.s8 %v622
    %v624 = vlaneseq
    %v625 = vshrl.u32 %v624, 7
    %v626 = vsub.s32 %v623, %v625
    %v627 = vrot.slane %v569, %v626
    %628 = vrot.lane.b32.xlu0 %v627, 64
    %v629 = vpop.permute.xlu0 %628
    %v631 = vmul.f32 %v610, %v629
    %632 = vrot.lane.b32.xlu0 %v285, 96
    %v633 = vpop.permute.xlu0 %632
    %v634 = vrot.slane %v633, 2
    %637 = vrot.lane.b32.xlu0 %v631, 32
    %v638 = vpop.permute.xlu0 %637
    %v640 = vadd.f32 %v634, %v638
    %v641 = vtanh.pop %v640
    %v642 = vsub.f32 1.0, %v619
    %v643 = vmul.f32 %v642, %v641
    %v644 = vmul.f32 %v619, %v473
    %v645 = vadd.f32 %v643, %v644
    %v648 = vunpack.c.l.s4 1983009808
    %v649 = vunpack.c.0.s8 %v648
    %v650 = vlaneseq
    %v651 = vshrl.u32 %v650, 7
    %v652 = vsub.s32 %v649, %v651
    %v653 = vrot.slane %v603, %v652
    %654 = vrot.lane.b32.xlu0 %v653, 96
    %v655 = vpop.permute.xlu0 %654
    %v659 = vunpack.c.l.s4 1983009808
    %v660 = vunpack.c.0.s8 %v659
    %v661 = vlaneseq
    %v662 = vshrl.u32 %v661, 7
    %v663 = vsub.s32 %v660, %v662
    %v664 = vrot.slane %v645, %v663
    %665 = vrot.lane.b32.xlu0 %v664, 32
    %v666 = vpop.permute.xlu0 %665
    %v668 = vsel %vm166, %v655, %v666
    %v670 = vsel %vm324, %v668, 0
    %672 = vmatprep.subr.mxu0 0.0
    %673 = vmatpush1.msra.mxu0 0.0
    %674 = vmatprep.subr.mxu0 0.0
    %675 = vmatpush1.msra.mxu0 0.0
    %676 = vmatprep.subr.mxu0 0.0
    %677 = vmatpush1.msra.mxu0 0.0
    %678 = vmatprep.subr.mxu0 0.0
    %679 = vmatpush1.msra.mxu0 0.0
    %680 = vmatprep.subr.mxu0 0.0
    %681 = vmatpush1.msra.mxu0 0.0
    %682 = vmatprep.subr.mxu0 0.0
    %683 = vmatpush1.msra.mxu0 0.0
    %684 = vmatprep.subr.mxu0 0.0
    %685 = vmatpush1.msra.mxu0 0.0
    %686 = vmatprep.subr.mxu0 0.0
    %687 = vmatpush1.msra.mxu0 0.0
    %688 = vmatprep.subr.mxu0 %v311
    %689 = vmatpush1.msra.mxu0 %v310
    %690 = vmatprep.subr.mxu0 %v309
    %691 = vmatpush1.msra.mxu0 %v308
    %692 = vmatprep.subr.mxu0 %v307
    %693 = vmatpush1.msra.mxu0 %v306
    %694 = vmatprep.subr.mxu0 %v305
    %695 = vmatpush1.msra.mxu0 %v304
    %696 = vmatprep.subr.mxu0 %v303
    %697 = vmatpush1.msra.mxu0 %v302
    %698 = vmatprep.subr.mxu0 %v301
    %699 = vmatpush1.msra.mxu0 %v300
    %700 = vmatprep.subr.mxu0 %v299
    %701 = vmatpush1.msra.mxu0 %v298
    %702 = vmatprep.subr.mxu0 %v297
    %703 = vmatpush1.msra.mxu0 %v296
    %704 = vmatprep.subr.mxu0 0.0
    %705 = vmatpush2.msra.mxu0 0.0
    %706 = vmatprep.subr.mxu0 0.0
    %707 = vmatpush2.msra.mxu0 0.0
    %708 = vmatprep.subr.mxu0 0.0
    %709 = vmatpush2.msra.mxu0 0.0
    %710 = vmatprep.subr.mxu0 0.0
    %711 = vmatpush2.msra.mxu0 0.0
    %712 = vmatprep.subr.mxu0 0.0
    %713 = vmatpush2.msra.mxu0 0.0
    %714 = vmatprep.subr.mxu0 0.0
    %715 = vmatpush2.msra.mxu0 0.0
    %716 = vmatprep.subr.mxu0 0.0
    %717 = vmatpush2.msra.mxu0 0.0
    %718 = vmatprep.subr.mxu0 0.0
    %719 = vmatpush2.msra.mxu0 0.0
    %720 = vmatprep.subr.mxu0 0.0
    %721 = vmatpush2.msra.mxu0 0.0
    %722 = vmatprep.subr.mxu0 0.0
    %723 = vmatpush2.msra.mxu0 0.0
    %724 = vmatprep.subr.mxu0 0.0
    %725 = vmatpush2.msra.mxu0 0.0
    %726 = vmatprep.subr.mxu0 0.0
    %727 = vmatpush2.msra.mxu0 0.0
    %728 = vmatprep.subr.mxu0 0.0
    %729 = vmatpush2.msra.mxu0 0.0
    %730 = vmatprep.subr.mxu0 0.0
    %731 = vmatpush2.msra.mxu0 0.0
    %732 = vmatprep.subr.mxu0 0.0
    %733 = vmatpush2.msra.mxu0 0.0
    %734 = vmatprep.subr.mxu0 0.0
    %735 = vmatpush2.msra.mxu0 0.0
    %736 = vmatprep.mubr.f32.mxu0 0.0
    %737 = vmatmul.mubr.f32.gmra.mxu0 %v670
    %v738 = vpop.f32.mrf.mxu0
    %v739 = vadd.f32 %v317, %v738
    %v740 = vpop.f32.mrf.mxu0
    %v741 = vadd.f32 %v321, %v740
    %742 = vdwg.mxu0
    %v743 = vadd.f32 %v267, %v739
    %v744 = vxor.u32 %v743, 2147483648
    %v745 = vmul.f32 %v744, 1.442695
    %v746 = vpow.pop %v745
    %v747 = vadd.f32 %v746, 1.0
    %v748 = vrcp.pop %v747
    %v749 = vmul.f32 1.0, %v748
    %v752 = vunpack.c.l.s4 1983009808
    %v753 = vunpack.c.0.s8 %v752
    %v754 = vlaneseq
    %v755 = vshrl.u32 %v754, 7
    %v756 = vsub.s32 %v753, %v755
    %v757 = vrot.slane %v739, %v756
    %758 = vrot.lane.b32.xlu0 %v757, 64
    %v759 = vpop.permute.xlu0 %758
    %v761 = vmul.f32 %v749, %v759
    %763 = vrot.lane.b32.xlu0 %v761, 64
    %v764 = vpop.permute.xlu0 %763
    %v766 = vadd.f32 %v267, %v764
    %v767 = vtanh.pop %v766
    %v768 = vsub.f32 1.0, %v749
    %770 = vrot.lane.b32.xlu0 %v767, 96
    %v771 = vpop.permute.xlu0 %770
    %v773 = vmul.f32 %v768, %v771
    %v774 = vmul.f32 %v749, %v603
    %v775 = vadd.f32 %v773, %v774
    %v776 = vadd.f32 %v286, %v739
    %v777 = vxor.u32 %v776, 2147483648
    %v778 = vmul.f32 %v777, 1.442695
    %v779 = vpow.pop %v778
    %v780 = vadd.f32 %v779, 1.0
    %v781 = vrcp.pop %v780
    %v782 = vmul.f32 1.0, %v781
    %v783 = vrot.slane %v286, 2
    %v785 = vadd.f32 %v783, %v741
    %v786 = vxor.u32 %v785, 2147483648
    %v787 = vmul.f32 %v786, 1.442695
    %v788 = vpow.pop %v787
    %v789 = vadd.f32 %v788, 1.0
    %v790 = vrcp.pop %v789
    %v791 = vmul.f32 1.0, %v790
    %v794 = vunpack.c.l.s4 1983009808
    %v795 = vunpack.c.0.s8 %v794
    %v796 = vlaneseq
    %v797 = vshrl.u32 %v796, 7
    %v798 = vsub.s32 %v795, %v797
    %v799 = vrot.slane %v741, %v798
    %800 = vrot.lane.b32.xlu0 %v799, 64
    %v801 = vpop.permute.xlu0 %800
    %v803 = vmul.f32 %v782, %v801
    %804 = vrot.lane.b32.xlu0 %v286, 96
    %v805 = vpop.permute.xlu0 %804
    %v806 = vrot.slane %v805, 2
    %809 = vrot.lane.b32.xlu0 %v803, 32
    %v810 = vpop.permute.xlu0 %809
    %v812 = vadd.f32 %v806, %v810
    %v813 = vtanh.pop %v812
    %v814 = vsub.f32 1.0, %v791
    %v815 = vmul.f32 %v814, %v813
    %v816 = vmul.f32 %v791, %v645
    %v817 = vadd.f32 %v815, %v816
    %v820 = vunpack.c.l.s4 1983009808
    %v821 = vunpack.c.0.s8 %v820
    %v822 = vlaneseq
    %v823 = vshrl.u32 %v822, 7
    %v824 = vsub.s32 %v821, %v823
    %v825 = vrot.slane %v775, %v824
    %826 = vrot.lane.b32.xlu0 %v825, 96
    %v827 = vpop.permute.xlu0 %826
    %v831 = vunpack.c.l.s4 1983009808
    %v832 = vunpack.c.0.s8 %v831
    %v833 = vlaneseq
    %v834 = vshrl.u32 %v833, 7
    %v835 = vsub.s32 %v832, %v834
    %v836 = vrot.slane %v817, %v835
    %837 = vrot.lane.b32.xlu0 %v836, 32
    %v838 = vpop.permute.xlu0 %837
    %v840 = vsel %vm166, %v827, %v838
    %v842 = vsel %vm324, %v840, 0
    %844 = vmatprep.subr.mxu0 0.0
    %845 = vmatpush1.msra.mxu0 0.0
    %846 = vmatprep.subr.mxu0 0.0
    %847 = vmatpush1.msra.mxu0 0.0
    %848 = vmatprep.subr.mxu0 0.0
    %849 = vmatpush1.msra.mxu0 0.0
    %850 = vmatprep.subr.mxu0 0.0
    %851 = vmatpush1.msra.mxu0 0.0
    %852 = vmatprep.subr.mxu0 0.0
    %853 = vmatpush1.msra.mxu0 0.0
    %854 = vmatprep.subr.mxu0 0.0
    %855 = vmatpush1.msra.mxu0 0.0
    %856 = vmatprep.subr.mxu0 0.0
    %857 = vmatpush1.msra.mxu0 0.0
    %858 = vmatprep.subr.mxu0 0.0
    %859 = vmatpush1.msra.mxu0 0.0
    %860 = vmatprep.subr.mxu0 %v311
    %861 = vmatpush1.msra.mxu0 %v310
    %862 = vmatprep.subr.mxu0 %v309
    %863 = vmatpush1.msra.mxu0 %v308
    %864 = vmatprep.subr.mxu0 %v307
    %865 = vmatpush1.msra.mxu0 %v306
    %866 = vmatprep.subr.mxu0 %v305
    %867 = vmatpush1.msra.mxu0 %v304
    %868 = vmatprep.subr.mxu0 %v303
    %869 = vmatpush1.msra.mxu0 %v302
    %870 = vmatprep.subr.mxu0 %v301
    %871 = vmatpush1.msra.mxu0 %v300
    %872 = vmatprep.subr.mxu0 %v299
    %873 = vmatpush1.msra.mxu0 %v298
    %874 = vmatprep.subr.mxu0 %v297
    %875 = vmatpush1.msra.mxu0 %v296
    %876 = vmatprep.subr.mxu0 0.0
    %877 = vmatpush2.msra.mxu0 0.0
    %878 = vmatprep.subr.mxu0 0.0
    %879 = vmatpush2.msra.mxu0 0.0
    %880 = vmatprep.subr.mxu0 0.0
    %881 = vmatpush2.msra.mxu0 0.0
    %882 = vmatprep.subr.mxu0 0.0
    %883 = vmatpush2.msra.mxu0 0.0
    %884 = vmatprep.subr.mxu0 0.0
    %885 = vmatpush2.msra.mxu0 0.0
    %886 = vmatprep.subr.mxu0 0.0
    %887 = vmatpush2.msra.mxu0 0.0
    %888 = vmatprep.subr.mxu0 0.0
    %889 = vmatpush2.msra.mxu0 0.0
    %890 = vmatprep.subr.mxu0 0.0
    %891 = vmatpush2.msra.mxu0 0.0
    %892 = vmatprep.subr.mxu0 0.0
    %893 = vmatpush2.msra.mxu0 0.0
    %894 = vmatprep.subr.mxu0 0.0
    %895 = vmatpush2.msra.mxu0 0.0
    %896 = vmatprep.subr.mxu0 0.0
    %897 = vmatpush2.msra.mxu0 0.0
    %898 = vmatprep.subr.mxu0 0.0
    %899 = vmatpush2.msra.mxu0 0.0
    %900 = vmatprep.subr.mxu0 0.0
    %901 = vmatpush2.msra.mxu0 0.0
    %902 = vmatprep.subr.mxu0 0.0
    %903 = vmatpush2.msra.mxu0 0.0
    %904 = vmatprep.subr.mxu0 0.0
    %905 = vmatpush2.msra.mxu0 0.0
    %906 = vmatprep.subr.mxu0 0.0
    %907 = vmatpush2.msra.mxu0 0.0
    %908 = vmatprep.mubr.f32.mxu0 0.0
    %909 = vmatmul.mubr.f32.gmra.mxu0 %v842
    %v910 = vpop.f32.mrf.mxu0
    %v911 = vadd.f32 %v317, %v910
    %v912 = vpop.f32.mrf.mxu0
    %v913 = vadd.f32 %v321, %v912
    %914 = vdwg.mxu0
    %v915 = vadd.f32 %v269, %v911
    %v916 = vxor.u32 %v915, 2147483648
    %v917 = vmul.f32 %v916, 1.442695
    %v918 = vpow.pop %v917
    %v919 = vadd.f32 %v918, 1.0
    %v920 = vrcp.pop %v919
    %v921 = vmul.f32 1.0, %v920
    %v924 = vunpack.c.l.s4 1983009808
    %v925 = vunpack.c.0.s8 %v924
    %v926 = vlaneseq
    %v927 = vshrl.u32 %v926, 7
    %v928 = vsub.s32 %v925, %v927
    %v929 = vrot.slane %v911, %v928
    %930 = vrot.lane.b32.xlu0 %v929, 64
    %v931 = vpop.permute.xlu0 %930
    %v933 = vmul.f32 %v921, %v931
    %935 = vrot.lane.b32.xlu0 %v933, 64
    %v936 = vpop.permute.xlu0 %935
    %v938 = vadd.f32 %v269, %v936
    %v939 = vtanh.pop %v938
    %v940 = vsub.f32 1.0, %v921
    %942 = vrot.lane.b32.xlu0 %v939, 96
    %v943 = vpop.permute.xlu0 %942
    %v945 = vmul.f32 %v940, %v943
    %v946 = vmul.f32 %v921, %v775
    %v947 = vadd.f32 %v945, %v946
    %v948 = vadd.f32 %v278, %v911
    %v949 = vxor.u32 %v948, 2147483648
    %v950 = vmul.f32 %v949, 1.442695
    %v951 = vpow.pop %v950
    %v952 = vadd.f32 %v951, 1.0
    %v953 = vrcp.pop %v952
    %v954 = vmul.f32 1.0, %v953
    %v955 = vrot.slane %v278, 2
    %v957 = vadd.f32 %v955, %v913
    %v958 = vxor.u32 %v957, 2147483648
    %v959 = vmul.f32 %v958, 1.442695
    %v960 = vpow.pop %v959
    %v961 = vadd.f32 %v960, 1.0
    %v962 = vrcp.pop %v961
    %v963 = vmul.f32 1.0, %v962
    %v966 = vunpack.c.l.s4 1983009808
    %v967 = vunpack.c.0.s8 %v966
    %v968 = vlaneseq
    %v969 = vshrl.u32 %v968, 7
    %v970 = vsub.s32 %v967, %v969
    %v971 = vrot.slane %v913, %v970
    %972 = vrot.lane.b32.xlu0 %v971, 64
    %v973 = vpop.permute.xlu0 %972
    %v975 = vmul.f32 %v954, %v973
    %976 = vrot.lane.b32.xlu0 %v278, 96
    %v977 = vpop.permute.xlu0 %976
    %v978 = vrot.slane %v977, 2
    %981 = vrot.lane.b32.xlu0 %v975, 32
    %v982 = vpop.permute.xlu0 %981
    %v984 = vadd.f32 %v978, %v982
    %v985 = vtanh.pop %v984
    %v986 = vsub.f32 1.0, %v963
    %v987 = vmul.f32 %v986, %v985
    %v988 = vmul.f32 %v963, %v817
    %v989 = vadd.f32 %v987, %v988
    %v992 = vunpack.c.l.s4 1983009808
    %v993 = vunpack.c.0.s8 %v992
    %v994 = vlaneseq
    %v995 = vshrl.u32 %v994, 7
    %v996 = vsub.s32 %v993, %v995
    %v997 = vrot.slane %v947, %v996
    %998 = vrot.lane.b32.xlu0 %v997, 96
    %v999 = vpop.permute.xlu0 %998
    %v1003 = vunpack.c.l.s4 1983009808
    %v1004 = vunpack.c.0.s8 %v1003
    %v1005 = vlaneseq
    %v1006 = vshrl.u32 %v1005, 7
    %v1007 = vsub.s32 %v1004, %v1006
    %v1008 = vrot.slane %v989, %v1007
    %1009 = vrot.lane.b32.xlu0 %v1008, 32
    %v1010 = vpop.permute.xlu0 %1009
    %v1012 = vsel %vm166, %v999, %v1010
    %v1014 = vsel %vm324, %v1012, 0
    %1016 = vmatprep.subr.mxu0 0.0
    %1017 = vmatpush1.msra.mxu0 0.0
    %1018 = vmatprep.subr.mxu0 0.0
    %1019 = vmatpush1.msra.mxu0 0.0
    %1020 = vmatprep.subr.mxu0 0.0
    %1021 = vmatpush1.msra.mxu0 0.0
    %1022 = vmatprep.subr.mxu0 0.0
    %1023 = vmatpush1.msra.mxu0 0.0
    %1024 = vmatprep.subr.mxu0 0.0
    %1025 = vmatpush1.msra.mxu0 0.0
    %1026 = vmatprep.subr.mxu0 0.0
    %1027 = vmatpush1.msra.mxu0 0.0
    %1028 = vmatprep.subr.mxu0 0.0
    %1029 = vmatpush1.msra.mxu0 0.0
    %1030 = vmatprep.subr.mxu0 0.0
    %1031 = vmatpush1.msra.mxu0 0.0
    %1032 = vmatprep.subr.mxu0 %v311
    %1033 = vmatpush1.msra.mxu0 %v310
    %1034 = vmatprep.subr.mxu0 %v309
    %1035 = vmatpush1.msra.mxu0 %v308
    %1036 = vmatprep.subr.mxu0 %v307
    %1037 = vmatpush1.msra.mxu0 %v306
    %1038 = vmatprep.subr.mxu0 %v305
    %1039 = vmatpush1.msra.mxu0 %v304
    %1040 = vmatprep.subr.mxu0 %v303
    %1041 = vmatpush1.msra.mxu0 %v302
    %1042 = vmatprep.subr.mxu0 %v301
    %1043 = vmatpush1.msra.mxu0 %v300
    %1044 = vmatprep.subr.mxu0 %v299
    %1045 = vmatpush1.msra.mxu0 %v298
    %1046 = vmatprep.subr.mxu0 %v297
    %1047 = vmatpush1.msra.mxu0 %v296
    %1048 = vmatprep.subr.mxu0 0.0
    %1049 = vmatpush2.msra.mxu0 0.0
    %1050 = vmatprep.subr.mxu0 0.0
    %1051 = vmatpush2.msra.mxu0 0.0
    %1052 = vmatprep.subr.mxu0 0.0
    %1053 = vmatpush2.msra.mxu0 0.0
    %1054 = vmatprep.subr.mxu0 0.0
    %1055 = vmatpush2.msra.mxu0 0.0
    %1056 = vmatprep.subr.mxu0 0.0
    %1057 = vmatpush2.msra.mxu0 0.0
    %1058 = vmatprep.subr.mxu0 0.0
    %1059 = vmatpush2.msra.mxu0 0.0
    %1060 = vmatprep.subr.mxu0 0.0
    %1061 = vmatpush2.msra.mxu0 0.0
    %1062 = vmatprep.subr.mxu0 0.0
    %1063 = vmatpush2.msra.mxu0 0.0
    %1064 = vmatprep.subr.mxu0 0.0
    %1065 = vmatpush2.msra.mxu0 0.0
    %1066 = vmatprep.subr.mxu0 0.0
    %1067 = vmatpush2.msra.mxu0 0.0
    %1068 = vmatprep.subr.mxu0 0.0
    %1069 = vmatpush2.msra.mxu0 0.0
    %1070 = vmatprep.subr.mxu0 0.0
    %1071 = vmatpush2.msra.mxu0 0.0
    %1072 = vmatprep.subr.mxu0 0.0
    %1073 = vmatpush2.msra.mxu0 0.0
    %1074 = vmatprep.subr.mxu0 0.0
    %1075 = vmatpush2.msra.mxu0 0.0
    %1076 = vmatprep.subr.mxu0 0.0
    %1077 = vmatpush2.msra.mxu0 0.0
    %1078 = vmatprep.subr.mxu0 0.0
    %1079 = vmatpush2.msra.mxu0 0.0
    %1080 = vmatprep.mubr.f32.mxu0 0.0
    %1081 = vmatmul.mubr.f32.gmra.mxu0 %v1014
    %v1082 = vpop.f32.mrf.mxu0
    %v1083 = vadd.f32 %v317, %v1082
    %v1084 = vpop.f32.mrf.mxu0
    %v1085 = vadd.f32 %v321, %v1084
    %1086 = vdwg.mxu0
    %v1087 = vadd.f32 %v278, %v1083
    %v1088 = vxor.u32 %v1087, 2147483648
    %v1089 = vmul.f32 %v1088, 1.442695
    %v1090 = vpow.pop %v1089
    %v1091 = vadd.f32 %v1090, 1.0
    %v1092 = vrcp.pop %v1091
    %v1093 = vmul.f32 1.0, %v1092
    %v1096 = vunpack.c.l.s4 1983009808
    %v1097 = vunpack.c.0.s8 %v1096
    %v1098 = vlaneseq
    %v1099 = vshrl.u32 %v1098, 7
    %v1100 = vsub.s32 %v1097, %v1099
    %v1101 = vrot.slane %v1083, %v1100
    %1102 = vrot.lane.b32.xlu0 %v1101, 64
    %v1103 = vpop.permute.xlu0 %1102
    %v1105 = vmul.f32 %v1093, %v1103
    %1107 = vrot.lane.b32.xlu0 %v1105, 64
    %v1108 = vpop.permute.xlu0 %1107
    %v1110 = vadd.f32 %v278, %v1108
    %v1111 = vtanh.pop %v1110
    %v1112 = vsub.f32 1.0, %v1093
    %1114 = vrot.lane.b32.xlu0 %v1111, 96
    %v1115 = vpop.permute.xlu0 %1114
    %v1117 = vmul.f32 %v1112, %v1115
    %v1118 = vmul.f32 %v1093, %v947
    %v1119 = vadd.f32 %v1117, %v1118
    %v1120 = vadd.f32 %v269, %v1083
    %v1121 = vxor.u32 %v1120, 2147483648
    %v1122 = vmul.f32 %v1121, 1.442695
    %v1123 = vpow.pop %v1122
    %v1124 = vadd.f32 %v1123, 1.0
    %v1125 = vrcp.pop %v1124
    %v1126 = vmul.f32 1.0, %v1125
    %v1127 = vrot.slane %v269, 2
    %v1129 = vadd.f32 %v1127, %v1085
    %v1130 = vxor.u32 %v1129, 2147483648
    %v1131 = vmul.f32 %v1130, 1.442695
    %v1132 = vpow.pop %v1131
    %v1133 = vadd.f32 %v1132, 1.0
    %v1134 = vrcp.pop %v1133
    %v1135 = vmul.f32 1.0, %v1134
    %v1138 = vunpack.c.l.s4 1983009808
    %v1139 = vunpack.c.0.s8 %v1138
    %v1140 = vlaneseq
    %v1141 = vshrl.u32 %v1140, 7
    %v1142 = vsub.s32 %v1139, %v1141
    %v1143 = vrot.slane %v1085, %v1142
    %1144 = vrot.lane.b32.xlu0 %v1143, 64
    %v1145 = vpop.permute.xlu0 %1144
    %v1147 = vmul.f32 %v1126, %v1145
    %1148 = vrot.lane.b32.xlu0 %v269, 96
    %v1149 = vpop.permute.xlu0 %1148
    %v1150 = vrot.slane %v1149, 2
    %1153 = vrot.lane.b32.xlu0 %v1147, 32
    %v1154 = vpop.permute.xlu0 %1153
    %v1156 = vadd.f32 %v1150, %v1154
    %v1157 = vtanh.pop %v1156
    %v1158 = vsub.f32 1.0, %v1135
    %v1159 = vmul.f32 %v1158, %v1157
    %v1160 = vmul.f32 %v1135, %v989
    %v1161 = vadd.f32 %v1159, %v1160
    %v1164 = vunpack.c.l.s4 1983009808
    %v1165 = vunpack.c.0.s8 %v1164
    %v1166 = vlaneseq
    %v1167 = vshrl.u32 %v1166, 7
    %v1168 = vsub.s32 %v1165, %v1167
    %v1169 = vrot.slane %v1119, %v1168
    %1170 = vrot.lane.b32.xlu0 %v1169, 96
    %v1171 = vpop.permute.xlu0 %1170
    %v1175 = vunpack.c.l.s4 1983009808
    %v1176 = vunpack.c.0.s8 %v1175
    %v1177 = vlaneseq
    %v1178 = vshrl.u32 %v1177, 7
    %v1179 = vsub.s32 %v1176, %v1178
    %v1180 = vrot.slane %v1161, %v1179
    %1181 = vrot.lane.b32.xlu0 %v1180, 32
    %v1182 = vpop.permute.xlu0 %1181
    %v1184 = vsel %vm166, %v1171, %v1182
    %v1186 = vsel %vm324, %v1184, 0
    %1188 = vmatprep.subr.mxu0 0.0
    %1189 = vmatpush1.msra.mxu0 0.0
    %1190 = vmatprep.subr.mxu0 0.0
    %1191 = vmatpush1.msra.mxu0 0.0
    %1192 = vmatprep.subr.mxu0 0.0
    %1193 = vmatpush1.msra.mxu0 0.0
    %1194 = vmatprep.subr.mxu0 0.0
    %1195 = vmatpush1.msra.mxu0 0.0
    %1196 = vmatprep.subr.mxu0 0.0
    %1197 = vmatpush1.msra.mxu0 0.0
    %1198 = vmatprep.subr.mxu0 0.0
    %1199 = vmatpush1.msra.mxu0 0.0
    %1200 = vmatprep.subr.mxu0 0.0
    %1201 = vmatpush1.msra.mxu0 0.0
    %1202 = vmatprep.subr.mxu0 0.0
    %1203 = vmatpush1.msra.mxu0 0.0
    %1204 = vmatprep.subr.mxu0 %v311
    %1205 = vmatpush1.msra.mxu0 %v310
    %1206 = vmatprep.subr.mxu0 %v309
    %1207 = vmatpush1.msra.mxu0 %v308
    %1208 = vmatprep.subr.mxu0 %v307
    %1209 = vmatpush1.msra.mxu0 %v306
    %1210 = vmatprep.subr.mxu0 %v305
    %1211 = vmatpush1.msra.mxu0 %v304
    %1212 = vmatprep.subr.mxu0 %v303
    %1213 = vmatpush1.msra.mxu0 %v302
    %1214 = vmatprep.subr.mxu0 %v301
    %1215 = vmatpush1.msra.mxu0 %v300
    %1216 = vmatprep.subr.mxu0 %v299
    %1217 = vmatpush1.msra.mxu0 %v298
    %1218 = vmatprep.subr.mxu0 %v297
    %1219 = vmatpush1.msra.mxu0 %v296
    %1220 = vmatprep.subr.mxu0 0.0
    %1221 = vmatpush2.msra.mxu0 0.0
    %1222 = vmatprep.subr.mxu0 0.0
    %1223 = vmatpush2.msra.mxu0 0.0
    %1224 = vmatprep.subr.mxu0 0.0
    %1225 = vmatpush2.msra.mxu0 0.0
    %1226 = vmatprep.subr.mxu0 0.0
    %1227 = vmatpush2.msra.mxu0 0.0
    %1228 = vmatprep.subr.mxu0 0.0
    %1229 = vmatpush2.msra.mxu0 0.0
    %1230 = vmatprep.subr.mxu0 0.0
    %1231 = vmatpush2.msra.mxu0 0.0
    %1232 = vmatprep.subr.mxu0 0.0
    %1233 = vmatpush2.msra.mxu0 0.0
    %1234 = vmatprep.subr.mxu0 0.0
    %1235 = vmatpush2.msra.mxu0 0.0
    %1236 = vmatprep.subr.mxu0 0.0
    %1237 = vmatpush2.msra.mxu0 0.0
    %1238 = vmatprep.subr.mxu0 0.0
    %1239 = vmatpush2.msra.mxu0 0.0
    %1240 = vmatprep.subr.mxu0 0.0
    %1241 = vmatpush2.msra.mxu0 0.0
    %1242 = vmatprep.subr.mxu0 0.0
    %1243 = vmatpush2.msra.mxu0 0.0
    %1244 = vmatprep.subr.mxu0 0.0
    %1245 = vmatpush2.msra.mxu0 0.0
    %1246 = vmatprep.subr.mxu0 0.0
    %1247 = vmatpush2.msra.mxu0 0.0
    %1248 = vmatprep.subr.mxu0 0.0
    %1249 = vmatpush2.msra.mxu0 0.0
    %1250 = vmatprep.subr.mxu0 0.0
    %1251 = vmatpush2.msra.mxu0 0.0
    %1252 = vmatprep.mubr.f32.mxu0 0.0
    %1253 = vmatmul.mubr.f32.gmra.mxu0 %v1186
    %v1254 = vpop.f32.mrf.mxu0
    %v1255 = vadd.f32 %v317, %v1254
    %v1256 = vpop.f32.mrf.mxu0
    %v1257 = vadd.f32 %v321, %v1256
    %1258 = vdwg.mxu0
    %v1259 = vadd.f32 %v286, %v1255
    %v1260 = vxor.u32 %v1259, 2147483648
    %v1261 = vmul.f32 %v1260, 1.442695
    %v1262 = vpow.pop %v1261
    %v1263 = vadd.f32 %v1262, 1.0
    %v1264 = vrcp.pop %v1263
    %v1265 = vmul.f32 1.0, %v1264
    %v1268 = vunpack.c.l.s4 1983009808
    %v1269 = vunpack.c.0.s8 %v1268
    %v1270 = vlaneseq
    %v1271 = vshrl.u32 %v1270, 7
    %v1272 = vsub.s32 %v1269, %v1271
    %v1273 = vrot.slane %v1255, %v1272
    %1274 = vrot.lane.b32.xlu0 %v1273, 64
    %v1275 = vpop.permute.xlu0 %1274
    %v1277 = vmul.f32 %v1265, %v1275
    %1279 = vrot.lane.b32.xlu0 %v1277, 64
    %v1280 = vpop.permute.xlu0 %1279
    %v1282 = vadd.f32 %v286, %v1280
    %v1283 = vtanh.pop %v1282
    %v1284 = vsub.f32 1.0, %v1265
    %1286 = vrot.lane.b32.xlu0 %v1283, 96
    %v1287 = vpop.permute.xlu0 %1286
    %v1289 = vmul.f32 %v1284, %v1287
    %v1290 = vmul.f32 %v1265, %v1119
    %v1291 = vadd.f32 %v1289, %v1290
    %v1292 = vadd.f32 %v267, %v1255
    %v1293 = vxor.u32 %v1292, 2147483648
    %v1294 = vmul.f32 %v1293, 1.442695
    %v1295 = vpow.pop %v1294
    %v1296 = vadd.f32 %v1295, 1.0
    %v1297 = vrcp.pop %v1296
    %v1298 = vmul.f32 1.0, %v1297
    %v1299 = vrot.slane %v267, 2
    %v1301 = vadd.f32 %v1299, %v1257
    %v1302 = vxor.u32 %v1301, 2147483648
    %v1303 = vmul.f32 %v1302, 1.442695
    %v1304 = vpow.pop %v1303
    %v1305 = vadd.f32 %v1304, 1.0
    %v1306 = vrcp.pop %v1305
    %v1307 = vmul.f32 1.0, %v1306
    %v1310 = vunpack.c.l.s4 1983009808
    %v1311 = vunpack.c.0.s8 %v1310
    %v1312 = vlaneseq
    %v1313 = vshrl.u32 %v1312, 7
    %v1314 = vsub.s32 %v1311, %v1313
    %v1315 = vrot.slane %v1257, %v1314
    %1316 = vrot.lane.b32.xlu0 %v1315, 64
    %v1317 = vpop.permute.xlu0 %1316
    %v1319 = vmul.f32 %v1298, %v1317
    %1320 = vrot.lane.b32.xlu0 %v267, 96
    %v1321 = vpop.permute.xlu0 %1320
    %v1322 = vrot.slane %v1321, 2
    %1325 = vrot.lane.b32.xlu0 %v1319, 32
    %v1326 = vpop.permute.xlu0 %1325
    %v1328 = vadd.f32 %v1322, %v1326
    %v1329 = vtanh.pop %v1328
    %v1330 = vsub.f32 1.0, %v1307
    %v1331 = vmul.f32 %v1330, %v1329
    %v1332 = vmul.f32 %v1307, %v1161
    %v1333 = vadd.f32 %v1331, %v1332
    %v1336 = vunpack.c.l.s4 1983009808
    %v1337 = vunpack.c.0.s8 %v1336
    %v1338 = vlaneseq
    %v1339 = vshrl.u32 %v1338, 7
    %v1340 = vsub.s32 %v1337, %v1339
    %v1341 = vrot.slane %v1291, %v1340
    %1342 = vrot.lane.b32.xlu0 %v1341, 96
    %v1343 = vpop.permute.xlu0 %1342
    %v1347 = vunpack.c.l.s4 1983009808
    %v1348 = vunpack.c.0.s8 %v1347
    %v1349 = vlaneseq
    %v1350 = vshrl.u32 %v1349, 7
    %v1351 = vsub.s32 %v1348, %v1350
    %v1352 = vrot.slane %v1333, %v1351
    %1353 = vrot.lane.b32.xlu0 %v1352, 32
    %v1354 = vpop.permute.xlu0 %1353
    %v1356 = vsel %vm166, %v1343, %v1354
    %v1358 = vsel %vm324, %v1356, 0
    %1360 = vmatprep.subr.mxu0 0.0
    %1361 = vmatpush1.msra.mxu0 0.0
    %1362 = vmatprep.subr.mxu0 0.0
    %1363 = vmatpush1.msra.mxu0 0.0
    %1364 = vmatprep.subr.mxu0 0.0
    %1365 = vmatpush1.msra.mxu0 0.0
    %1366 = vmatprep.subr.mxu0 0.0
    %1367 = vmatpush1.msra.mxu0 0.0
    %1368 = vmatprep.subr.mxu0 0.0
    %1369 = vmatpush1.msra.mxu0 0.0
    %1370 = vmatprep.subr.mxu0 0.0
    %1371 = vmatpush1.msra.mxu0 0.0
    %1372 = vmatprep.subr.mxu0 0.0
    %1373 = vmatpush1.msra.mxu0 0.0
    %1374 = vmatprep.subr.mxu0 0.0
    %1375 = vmatpush1.msra.mxu0 0.0
    %1376 = vmatprep.subr.mxu0 %v311
    %1377 = vmatpush1.msra.mxu0 %v310
    %1378 = vmatprep.subr.mxu0 %v309
    %1379 = vmatpush1.msra.mxu0 %v308
    %1380 = vmatprep.subr.mxu0 %v307
    %1381 = vmatpush1.msra.mxu0 %v306
    %1382 = vmatprep.subr.mxu0 %v305
    %1383 = vmatpush1.msra.mxu0 %v304
    %1384 = vmatprep.subr.mxu0 %v303
    %1385 = vmatpush1.msra.mxu0 %v302
    %1386 = vmatprep.subr.mxu0 %v301
    %1387 = vmatpush1.msra.mxu0 %v300
    %1388 = vmatprep.subr.mxu0 %v299
    %1389 = vmatpush1.msra.mxu0 %v298
    %1390 = vmatprep.subr.mxu0 %v297
    %1391 = vmatpush1.msra.mxu0 %v296
    %1392 = vmatprep.subr.mxu0 0.0
    %1393 = vmatpush2.msra.mxu0 0.0
    %1394 = vmatprep.subr.mxu0 0.0
    %1395 = vmatpush2.msra.mxu0 0.0
    %1396 = vmatprep.subr.mxu0 0.0
    %1397 = vmatpush2.msra.mxu0 0.0
    %1398 = vmatprep.subr.mxu0 0.0
    %1399 = vmatpush2.msra.mxu0 0.0
    %1400 = vmatprep.subr.mxu0 0.0
    %1401 = vmatpush2.msra.mxu0 0.0
    %1402 = vmatprep.subr.mxu0 0.0
    %1403 = vmatpush2.msra.mxu0 0.0
    %1404 = vmatprep.subr.mxu0 0.0
    %1405 = vmatpush2.msra.mxu0 0.0
    %1406 = vmatprep.subr.mxu0 0.0
    %1407 = vmatpush2.msra.mxu0 0.0
    %1408 = vmatprep.subr.mxu0 0.0
    %1409 = vmatpush2.msra.mxu0 0.0
    %1410 = vmatprep.subr.mxu0 0.0
    %1411 = vmatpush2.msra.mxu0 0.0
    %1412 = vmatprep.subr.mxu0 0.0
    %1413 = vmatpush2.msra.mxu0 0.0
    %1414 = vmatprep.subr.mxu0 0.0
    %1415 = vmatpush2.msra.mxu0 0.0
    %1416 = vmatprep.subr.mxu0 0.0
    %1417 = vmatpush2.msra.mxu0 0.0
    %1418 = vmatprep.subr.mxu0 0.0
    %1419 = vmatpush2.msra.mxu0 0.0
    %1420 = vmatprep.subr.mxu0 0.0
    %1421 = vmatpush2.msra.mxu0 0.0
    %1422 = vmatprep.subr.mxu0 0.0
    %1423 = vmatpush2.msra.mxu0 0.0
    %1424 = vmatprep.mubr.f32.mxu0 0.0
    %1425 = vmatmul.mubr.f32.gmra.mxu0 %v1358
    %v1426 = vpop.f32.mrf.mxu0
    %v1427 = vadd.f32 %v317, %v1426
    %v1428 = vpop.f32.mrf.mxu0
    %v1429 = vadd.f32 %v321, %v1428
    %1430 = vdwg.mxu0
    %v1431 = vadd.f32 %v285, %v1427
    %v1432 = vxor.u32 %v1431, 2147483648
    %v1433 = vmul.f32 %v1432, 1.442695
    %v1434 = vpow.pop %v1433
    %v1435 = vadd.f32 %v1434, 1.0
    %v1436 = vrcp.pop %v1435
    %v1437 = vmul.f32 1.0, %v1436
    %v1440 = vunpack.c.l.s4 1983009808
    %v1441 = vunpack.c.0.s8 %v1440
    %v1442 = vlaneseq
    %v1443 = vshrl.u32 %v1442, 7
    %v1444 = vsub.s32 %v1441, %v1443
    %v1445 = vrot.slane %v1427, %v1444
    %1446 = vrot.lane.b32.xlu0 %v1445, 64
    %v1447 = vpop.permute.xlu0 %1446
    %v1449 = vmul.f32 %v1437, %v1447
    %1451 = vrot.lane.b32.xlu0 %v1449, 64
    %v1452 = vpop.permute.xlu0 %1451
    %v1454 = vadd.f32 %v285, %v1452
    %v1455 = vtanh.pop %v1454
    %v1456 = vsub.f32 1.0, %v1437
    %1458 = vrot.lane.b32.xlu0 %v1455, 96
    %v1459 = vpop.permute.xlu0 %1458
    %v1461 = vmul.f32 %v1456, %v1459
    %v1462 = vmul.f32 %v1437, %v1291
    %v1463 = vadd.f32 %v1461, %v1462
    %v1464 = vadd.f32 %v268, %v1427
    %v1465 = vxor.u32 %v1464, 2147483648
    %v1466 = vmul.f32 %v1465, 1.442695
    %v1467 = vpow.pop %v1466
    %v1468 = vadd.f32 %v1467, 1.0
    %v1469 = vrcp.pop %v1468
    %v1470 = vmul.f32 1.0, %v1469
    %v1471 = vrot.slane %v268, 2
    %v1473 = vadd.f32 %v1471, %v1429
    %v1474 = vxor.u32 %v1473, 2147483648
    %v1475 = vmul.f32 %v1474, 1.442695
    %v1476 = vpow.pop %v1475
    %v1477 = vadd.f32 %v1476, 1.0
    %v1478 = vrcp.pop %v1477
    %v1479 = vmul.f32 1.0, %v1478
    %v1482 = vunpack.c.l.s4 1983009808
    %v1483 = vunpack.c.0.s8 %v1482
    %v1484 = vlaneseq
    %v1485 = vshrl.u32 %v1484, 7
    %v1486 = vsub.s32 %v1483, %v1485
    %v1487 = vrot.slane %v1429, %v1486
    %1488 = vrot.lane.b32.xlu0 %v1487, 64
    %v1489 = vpop.permute.xlu0 %1488
    %v1491 = vmul.f32 %v1470, %v1489
    %1492 = vrot.lane.b32.xlu0 %v268, 96
    %v1493 = vpop.permute.xlu0 %1492
    %v1494 = vrot.slane %v1493, 2
    %1497 = vrot.lane.b32.xlu0 %v1491, 32
    %v1498 = vpop.permute.xlu0 %1497
    %v1500 = vadd.f32 %v1494, %v1498
    %v1501 = vtanh.pop %v1500
    %v1502 = vsub.f32 1.0, %v1479
    %v1503 = vmul.f32 %v1502, %v1501
    %v1504 = vmul.f32 %v1479, %v1333
    %v1505 = vadd.f32 %v1503, %v1504
    %v1508 = vunpack.c.l.s4 1983009808
    %v1509 = vunpack.c.0.s8 %v1508
    %v1510 = vlaneseq
    %v1511 = vshrl.u32 %v1510, 7
    %v1512 = vsub.s32 %v1509, %v1511
    %v1513 = vrot.slane %v1463, %v1512
    %1514 = vrot.lane.b32.xlu0 %v1513, 96
    %v1515 = vpop.permute.xlu0 %1514
    %v1519 = vunpack.c.l.s4 1983009808
    %v1520 = vunpack.c.0.s8 %v1519
    %v1521 = vlaneseq
    %v1522 = vshrl.u32 %v1521, 7
    %v1523 = vsub.s32 %v1520, %v1522
    %v1524 = vrot.slane %v1505, %v1523
    %1525 = vrot.lane.b32.xlu0 %v1524, 32
    %v1526 = vpop.permute.xlu0 %1525
    %v1528 = vsel %vm166, %v1515, %v1526
    %v1530 = vsel %vm324, %v1528, 0
    %1532 = vmatprep.subr.mxu0 0.0
    %1533 = vmatpush1.msra.mxu0 0.0
    %1534 = vmatprep.subr.mxu0 0.0
    %1535 = vmatpush1.msra.mxu0 0.0
    %1536 = vmatprep.subr.mxu0 0.0
    %1537 = vmatpush1.msra.mxu0 0.0
    %1538 = vmatprep.subr.mxu0 0.0
    %1539 = vmatpush1.msra.mxu0 0.0
    %1540 = vmatprep.subr.mxu0 0.0
    %1541 = vmatpush1.msra.mxu0 0.0
    %1542 = vmatprep.subr.mxu0 0.0
    %1543 = vmatpush1.msra.mxu0 0.0
    %1544 = vmatprep.subr.mxu0 0.0
    %1545 = vmatpush1.msra.mxu0 0.0
    %1546 = vmatprep.subr.mxu0 0.0
    %1547 = vmatpush1.msra.mxu0 0.0
    %1548 = vmatprep.subr.mxu0 %v311
    %1549 = vmatpush1.msra.mxu0 %v310
    %1550 = vmatprep.subr.mxu0 %v309
    %1551 = vmatpush1.msra.mxu0 %v308
    %1552 = vmatprep.subr.mxu0 %v307
    %1553 = vmatpush1.msra.mxu0 %v306
    %1554 = vmatprep.subr.mxu0 %v305
    %1555 = vmatpush1.msra.mxu0 %v304
    %1556 = vmatprep.subr.mxu0 %v303
    %1557 = vmatpush1.msra.mxu0 %v302
    %1558 = vmatprep.subr.mxu0 %v301
    %1559 = vmatpush1.msra.mxu0 %v300
    %1560 = vmatprep.subr.mxu0 %v299
    %1561 = vmatpush1.msra.mxu0 %v298
    %1562 = vmatprep.subr.mxu0 %v297
    %1563 = vmatpush1.msra.mxu0 %v296
    %1564 = vmatprep.subr.mxu0 0.0
    %1565 = vmatpush2.msra.mxu0 0.0
    %1566 = vmatprep.subr.mxu0 0.0
    %1567 = vmatpush2.msra.mxu0 0.0
    %1568 = vmatprep.subr.mxu0 0.0
    %1569 = vmatpush2.msra.mxu0 0.0
    %1570 = vmatprep.subr.mxu0 0.0
    %1571 = vmatpush2.msra.mxu0 0.0
    %1572 = vmatprep.subr.mxu0 0.0
    %1573 = vmatpush2.msra.mxu0 0.0
    %1574 = vmatprep.subr.mxu0 0.0
    %1575 = vmatpush2.msra.mxu0 0.0
    %1576 = vmatprep.subr.mxu0 0.0
    %1577 = vmatpush2.msra.mxu0 0.0
    %1578 = vmatprep.subr.mxu0 0.0
    %1579 = vmatpush2.msra.mxu0 0.0
    %1580 = vmatprep.subr.mxu0 0.0
    %1581 = vmatpush2.msra.mxu0 0.0
    %1582 = vmatprep.subr.mxu0 0.0
    %1583 = vmatpush2.msra.mxu0 0.0
    %1584 = vmatprep.subr.mxu0 0.0
    %1585 = vmatpush2.msra.mxu0 0.0
    %1586 = vmatprep.subr.mxu0 0.0
    %1587 = vmatpush2.msra.mxu0 0.0
    %1588 = vmatprep.subr.mxu0 0.0
    %1589 = vmatpush2.msra.mxu0 0.0
    %1590 = vmatprep.subr.mxu0 0.0
    %1591 = vmatpush2.msra.mxu0 0.0
    %1592 = vmatprep.subr.mxu0 0.0
    %1593 = vmatpush2.msra.mxu0 0.0
    %1594 = vmatprep.subr.mxu0 0.0
    %1595 = vmatpush2.msra.mxu0 0.0
    %1596 = vmatprep.mubr.f32.mxu0 0.0
    %1597 = vmatmul.mubr.f32.gmra.mxu0 %v1530
    %v1598 = vpop.f32.mrf.mxu0
    %v1599 = vadd.f32 %v317, %v1598
    %v1600 = vpop.f32.mrf.mxu0
    %v1601 = vadd.f32 %v321, %v1600
    %1602 = vdwg.mxu0
    %v1603 = vadd.f32 %v287, %v1599
    %v1604 = vxor.u32 %v1603, 2147483648
    %v1605 = vmul.f32 %v1604, 1.442695
    %v1606 = vpow.pop %v1605
    %v1607 = vadd.f32 %v1606, 1.0
    %v1608 = vrcp.pop %v1607
    %v1609 = vmul.f32 1.0, %v1608
    %v1612 = vunpack.c.l.s4 1983009808
    %v1613 = vunpack.c.0.s8 %v1612
    %v1614 = vlaneseq
    %v1615 = vshrl.u32 %v1614, 7
    %v1616 = vsub.s32 %v1613, %v1615
    %v1617 = vrot.slane %v1599, %v1616
    %1618 = vrot.lane.b32.xlu0 %v1617, 64
    %v1619 = vpop.permute.xlu0 %1618
    %v1621 = vmul.f32 %v1609, %v1619
    %1623 = vrot.lane.b32.xlu0 %v1621, 64
    %v1624 = vpop.permute.xlu0 %1623
    %v1626 = vadd.f32 %v287, %v1624
    %v1627 = vtanh.pop %v1626
    %v1628 = vsub.f32 1.0, %v1609
    %1630 = vrot.lane.b32.xlu0 %v1627, 96
    %v1631 = vpop.permute.xlu0 %1630
    %v1633 = vmul.f32 %v1628, %v1631
    %v1634 = vmul.f32 %v1609, %v1463
    %v1635 = vadd.f32 %v1633, %v1634
    %v1636 = vadd.f32 %v260, %v1599
    %v1637 = vxor.u32 %v1636, 2147483648
    %v1638 = vmul.f32 %v1637, 1.442695
    %v1639 = vpow.pop %v1638
    %v1640 = vadd.f32 %v1639, 1.0
    %v1641 = vrcp.pop %v1640
    %v1642 = vmul.f32 1.0, %v1641
    %v1643 = vrot.slane %v260, 2
    %v1645 = vadd.f32 %v1643, %v1601
    %v1646 = vxor.u32 %v1645, 2147483648
    %v1647 = vmul.f32 %v1646, 1.442695
    %v1648 = vpow.pop %v1647
    %v1649 = vadd.f32 %v1648, 1.0
    %v1650 = vrcp.pop %v1649
    %v1651 = vmul.f32 1.0, %v1650
    %v1654 = vunpack.c.l.s4 1983009808
    %v1655 = vunpack.c.0.s8 %v1654
    %v1656 = vlaneseq
    %v1657 = vshrl.u32 %v1656, 7
    %v1658 = vsub.s32 %v1655, %v1657
    %v1659 = vrot.slane %v1601, %v1658
    %1660 = vrot.lane.b32.xlu0 %v1659, 64
    %v1661 = vpop.permute.xlu0 %1660
    %v1663 = vmul.f32 %v1642, %v1661
    %1664 = vrot.lane.b32.xlu0 %v260, 96
    %v1665 = vpop.permute.xlu0 %1664
    %v1666 = vrot.slane %v1665, 2
    %1669 = vrot.lane.b32.xlu0 %v1663, 32
    %v1670 = vpop.permute.xlu0 %1669
    %v1672 = vadd.f32 %v1666, %v1670
    %v1673 = vtanh.pop %v1672
    %v1674 = vsub.f32 1.0, %v1651
    %v1675 = vmul.f32 %v1674, %v1673
    %v1676 = vmul.f32 %v1651, %v1505
    %v1677 = vadd.f32 %v1675, %v1676
    %v1680 = vunpack.c.l.s4 1983009808
    %v1681 = vunpack.c.0.s8 %v1680
    %v1682 = vlaneseq
    %v1683 = vshrl.u32 %v1682, 7
    %v1684 = vsub.s32 %v1681, %v1683
    %v1685 = vrot.slane %v1677, %v1684
    %1686 = vrot.lane.b32.xlu0 %v1685, 32
    %v1687 = vpop.permute.xlu0 %1686
    %v1689 = vsel %vm166, %v483, %v1687
    %v1690 = vsel %vm166, %v655, %v1526
    %v1691 = vsel %vm166, %v827, %v1354
    %v1692 = vsel %vm166, %v999, %v1182
    %v1693 = vsel %vm166, %v1171, %v1010
    %v1694 = vsel %vm166, %v1343, %v838
    %v1695 = vsel %vm166, %v1515, %v666
    %v1698 = vunpack.c.l.s4 1983009808
    %v1699 = vunpack.c.0.s8 %v1698
    %v1700 = vlaneseq
    %v1701 = vshrl.u32 %v1700, 7
    %v1702 = vsub.s32 %v1699, %v1701
    %v1703 = vrot.slane %v1635, %v1702
    %1704 = vrot.lane.b32.xlu0 %v1703, 96
    %v1705 = vpop.permute.xlu0 %1704
    %v1707 = vsel %vm166, %v1705, %v494
    %v1708 = vld [vmem:[#allocation10] sm:$0xff]
    %v1709 = vld [vmem:[#allocation10 + $0x8] sm:$0xff]
    %v1710 = vld [vmem:[#allocation10 + $0x10] sm:$0xff]
    %v1711 = vld [vmem:[#allocation10 + $0x18] sm:$0xff]
    %v1712 = vld [vmem:[#allocation10 + $0x20] sm:$0xff]
    %v1713 = vld [vmem:[#allocation10 + $0x28] sm:$0xff]
    %v1714 = vld [vmem:[#allocation10 + $0x30] sm:$0xff]
    %v1715 = vld [vmem:[#allocation10 + $0x38] sm:$0xff]
    %v1716 = vld [vmem:[%s6] sm:$0x1]
    %v1718 = vlaneseq
    %v1719 = vshrl.u32 %v1718, 7
    %v1720 = vsub.s32 0, %v1719
    %v1721 = vrot.slane %v1716, %v1720
    %v1731 = vcombine.low %v1689, %v1690
    %v1732 = vcombine.low %v1691, %v1692
    %v1734 = vunpack.c.l.s4 1983009808
    %v1735 = vunpack.c.0.s8 %v1734
    %v1736 = vlaneseq
    %v1737 = vshrl.u32 %v1736, 7
    %v1738 = vsub.s32 %v1735, %v1737
    %v1739 = vrot.slane %v1731, %v1738
    %v1741 = vunpack.c.l.s4 1983009808
    %v1742 = vunpack.c.0.s8 %v1741
    %v1743 = vlaneseq
    %v1744 = vshrl.u32 %v1743, 7
    %v1745 = vsub.s32 %v1742, %v1744
    %v1746 = vrot.slane %v1732, %v1745
    %v1747 = vcombine.low %v1739, %v1746
    %v1748 = vcombine.low %v1693, %v1694
    %v1749 = vcombine.low %v1695, %v1707
    %v1751 = vunpack.c.l.s4 1983009808
    %v1752 = vunpack.c.0.s8 %v1751
    %v1753 = vlaneseq
    %v1754 = vshrl.u32 %v1753, 7
    %v1755 = vsub.s32 %v1752, %v1754
    %v1756 = vrot.slane %v1748, %v1755
    %v1758 = vunpack.c.l.s4 1983009808
    %v1759 = vunpack.c.0.s8 %v1758
    %v1760 = vlaneseq
    %v1761 = vshrl.u32 %v1760, 7
    %v1762 = vsub.s32 %v1759, %v1761
    %v1763 = vrot.slane %v1749, %v1762
    %v1764 = vcombine.low %v1756, %v1763
    %v1765 = vsel %vm324, %v1747, 0
    %v1767 = vsel %vm324, %v1764, 0
    %1769 = vmatprep.subr.mxu0 0.0
    %1770 = vmatpush1.msra.mxu0 0.0
    %1771 = vmatprep.subr.mxu0 0.0
    %1772 = vmatpush1.msra.mxu0 0.0
    %1773 = vmatprep.subr.mxu0 0.0
    %1774 = vmatpush1.msra.mxu0 0.0
    %1775 = vmatprep.subr.mxu0 0.0
    %1776 = vmatpush1.msra.mxu0 0.0
    %1777 = vmatprep.subr.mxu0 0.0
    %1778 = vmatpush1.msra.mxu0 0.0
    %1779 = vmatprep.subr.mxu0 0.0
    %1780 = vmatpush1.msra.mxu0 0.0
    %1781 = vmatprep.subr.mxu0 0.0
    %1782 = vmatpush1.msra.mxu0 0.0
    %1783 = vmatprep.subr.mxu0 0.0
    %1784 = vmatpush1.msra.mxu0 0.0
    %1785 = vmatprep.subr.mxu0 0.0
    %1786 = vmatpush1.msra.mxu0 %v1715
    %1787 = vmatprep.subr.mxu0 0.0
    %1788 = vmatpush1.msra.mxu0 %v1714
    %1789 = vmatprep.subr.mxu0 0.0
    %1790 = vmatpush1.msra.mxu0 %v1713
    %1791 = vmatprep.subr.mxu0 0.0
    %1792 = vmatpush1.msra.mxu0 %v1712
    %1793 = vmatprep.subr.mxu0 0.0
    %1794 = vmatpush1.msra.mxu0 %v1711
    %1795 = vmatprep.subr.mxu0 0.0
    %1796 = vmatpush1.msra.mxu0 %v1710
    %1797 = vmatprep.subr.mxu0 0.0
    %1798 = vmatpush1.msra.mxu0 %v1709
    %1799 = vmatprep.subr.mxu0 0.0
    %1800 = vmatpush1.msra.mxu0 %v1708
    %1801 = vmatprep.subr.mxu0 0.0
    %1802 = vmatpush2.msra.mxu0 0.0
    %1803 = vmatprep.subr.mxu0 0.0
    %1804 = vmatpush2.msra.mxu0 0.0
    %1805 = vmatprep.subr.mxu0 0.0
    %1806 = vmatpush2.msra.mxu0 0.0
    %1807 = vmatprep.subr.mxu0 0.0
    %1808 = vmatpush2.msra.mxu0 0.0
    %1809 = vmatprep.subr.mxu0 0.0
    %1810 = vmatpush2.msra.mxu0 0.0
    %1811 = vmatprep.subr.mxu0 0.0
    %1812 = vmatpush2.msra.mxu0 0.0
    %1813 = vmatprep.subr.mxu0 0.0
    %1814 = vmatpush2.msra.mxu0 0.0
    %1815 = vmatprep.subr.mxu0 0.0
    %1816 = vmatpush2.msra.mxu0 0.0
    %1817 = vmatprep.subr.mxu0 0.0
    %1818 = vmatpush2.msra.mxu0 0.0
    %1819 = vmatprep.subr.mxu0 0.0
    %1820 = vmatpush2.msra.mxu0 0.0
    %1821 = vmatprep.subr.mxu0 0.0
    %1822 = vmatpush2.msra.mxu0 0.0
    %1823 = vmatprep.subr.mxu0 0.0
    %1824 = vmatpush2.msra.mxu0 0.0
    %1825 = vmatprep.subr.mxu0 0.0
    %1826 = vmatpush2.msra.mxu0 0.0
    %1827 = vmatprep.subr.mxu0 0.0
    %1828 = vmatpush2.msra.mxu0 0.0
    %1829 = vmatprep.subr.mxu0 0.0
    %1830 = vmatpush2.msra.mxu0 0.0
    %1831 = vmatprep.subr.mxu0 0.0
    %1832 = vmatpush2.msra.mxu0 0.0
    %1833 = vmatprep.mubr.f32.mxu0 0.0
    %1834 = vmatmul.mubr.f32.gmra.mxu0 %v1765
    %v1835 = vpop.f32.mrf.mxu0
    %v1836 = vadd.f32 %v1721, %v1835
    %v1837 = vpop.f32.mrf.mxu0
    %1838 = vmatprep.mubr.f32.mxu0 0.0
    %1839 = vmatmul.mubr.f32.gmra.mxu0 %v1767
    %v1840 = vpop.f32.mrf.mxu0
    %v1841 = vadd.f32 %v1721, %v1840
    %v1842 = vpop.f32.mrf.mxu0
    %1843 = vdwg.mxu0
    %v1844 = vtanh.pop %v1836
    %v1845 = vtanh.pop %v1841
    %v1848 = vcombine.high %v1844, %v1844
    %v1850 = vunpack.c.l.s4 1983009808
    %v1851 = vunpack.c.0.s8 %v1850
    %v1852 = vlaneseq
    %v1853 = vshrl.u32 %v1852, 7
    %v1854 = vsub.s32 %v1851, %v1853
    %v1855 = vrot.slane %v1844, %v1854
    %v1857 = vunpack.c.l.s4 1983009808
    %v1858 = vunpack.c.0.s8 %v1857
    %v1859 = vlaneseq
    %v1860 = vshrl.u32 %v1859, 7
    %v1861 = vsub.s32 %v1858, %v1860
    %v1862 = vrot.slane %v1848, %v1861
    %v1863 = vcombine.high %v1855, %v1855
    %v1864 = vcombine.high %v1862, %v1862
    %v1865 = vcombine.high %v1845, %v1845
    %v1867 = vunpack.c.l.s4 1983009808
    %v1868 = vunpack.c.0.s8 %v1867
    %v1869 = vlaneseq
    %v1870 = vshrl.u32 %v1869, 7
    %v1871 = vsub.s32 %v1868, %v1870
    %v1872 = vrot.slane %v1845, %v1871
    %v1874 = vunpack.c.l.s4 1983009808
    %v1875 = vunpack.c.0.s8 %v1874
    %v1876 = vlaneseq
    %v1877 = vshrl.u32 %v1876, 7
    %v1878 = vsub.s32 %v1875, %v1877
    %v1879 = vrot.slane %v1865, %v1878
    %v1880 = vcombine.high %v1872, %v1872
    %v1881 = vcombine.high %v1879, %v1879
    %v1890 = vld [vmem:[%s7] sm:$0x1]
    %v1892 = vlaneseq
    %v1893 = vshrl.u32 %v1892, 7
    %v1894 = vsub.s32 0, %v1893
    %v1895 = vrot.slane %v1890, %v1894
    %v1897 = vmul.f32 %v1855, %v1895
    %v1898 = vmul.f32 %v1863, %v1895
    %v1899 = vmul.f32 %v1862, %v1895
    %v1900 = vmul.f32 %v1864, %v1895
    %v1901 = vmul.f32 %v1872, %v1895
    %v1902 = vmul.f32 %v1880, %v1895
    %v1903 = vmul.f32 %v1879, %v1895
    %v1904 = vmul.f32 %v1881, %v1895
    %vm1905 = vcmask 517120
    %v1906 = vsel %vm1905, %v1897, 0.0
    %1907 = vadd.xlane.f32.xlu0 %v1906
    %v1908 = vpop.xlane.xlu0 %1907
    %v1909 = vsel %vm1905, %v1898, 0.0
    %1910 = vadd.xlane.f32.xlu0 %v1909
    %v1911 = vpop.xlane.xlu0 %1910
    %v1912 = vsel %vm1905, %v1899, 0.0
    %1913 = vadd.xlane.f32.xlu0 %v1912
    %v1914 = vpop.xlane.xlu0 %1913
    %v1915 = vsel %vm1905, %v1900, 0.0
    %1916 = vadd.xlane.f32.xlu0 %v1915
    %v1917 = vpop.xlane.xlu0 %1916
    %v1918 = vsel %vm1905, %v1901, 0.0
    %1919 = vadd.xlane.f32.xlu0 %v1918
    %v1920 = vpop.xlane.xlu0 %1919
    %v1921 = vsel %vm1905, %v1902, 0.0
    %1922 = vadd.xlane.f32.xlu0 %v1921
    %v1923 = vpop.xlane.xlu0 %1922
    %v1924 = vsel %vm1905, %v1903, 0.0
    %1925 = vadd.xlane.f32.xlu0 %v1924
    %v1926 = vpop.xlane.xlu0 %1925
    %v1927 = vsel %vm1905, %v1904, 0.0
    %1928 = vadd.xlane.f32.xlu0 %v1927
    %v1929 = vpop.xlane.xlu0 %1928
    %v1938 = vlaneseq
    %v1939 = vand.u32 %v1938, 127
    %v1940 = vlaneseq
    %v1941 = vshrl.u32 %v1940, 7
    %v1942 = vsub.s32 %v1939, %v1941
    %v1943 = vrot.slane %v1908, %v1942
    %v1944 = vlaneseq
    %v1945 = vshrl.u32 %v1944, 7
    %v1946 = vsub.s32 %v1939, %v1945
    %v1947 = vrot.slane %v1911, %v1946
    %v1948 = vlaneseq
    %v1949 = vshrl.u32 %v1948, 7
    %v1950 = vsub.s32 %v1939, %v1949
    %v1951 = vrot.slane %v1914, %v1950
    %v1952 = vlaneseq
    %v1953 = vshrl.u32 %v1952, 7
    %v1954 = vsub.s32 %v1939, %v1953
    %v1955 = vrot.slane %v1917, %v1954
    %v1956 = vlaneseq
    %v1957 = vshrl.u32 %v1956, 7
    %v1958 = vsub.s32 %v1939, %v1957
    %v1959 = vrot.slane %v1920, %v1958
    %v1960 = vlaneseq
    %v1961 = vshrl.u32 %v1960, 7
    %v1962 = vsub.s32 %v1939, %v1961
    %v1963 = vrot.slane %v1923, %v1962
    %v1964 = vlaneseq
    %v1965 = vshrl.u32 %v1964, 7
    %v1966 = vsub.s32 %v1939, %v1965
    %v1967 = vrot.slane %v1926, %v1966
    %v1968 = vlaneseq
    %v1969 = vshrl.u32 %v1968, 7
    %v1970 = vsub.s32 %v1939, %v1969
    %v1971 = vrot.slane %v1929, %v1970
    %vm1972 = vcmask 1041409
    %v1973 = vsel %vm1972, %v1947, %v1943
    %vm1974 = vcmask 1042434
    %v1975 = vsel %vm1974, %v1951, %v1973
    %vm1976 = vcmask 1043459
    %v1977 = vsel %vm1976, %v1955, %v1975
    %vm1978 = vcmask 1044484
    %v1979 = vsel %vm1978, %v1959, %v1977
    %vm1980 = vcmask 1045509
    %v1981 = vsel %vm1980, %v1963, %v1979
    %vm1982 = vcmask 1046534
    %v1983 = vsel %vm1982, %v1967, %v1981
    %vm1984 = vcmask 1047559
    %v1985 = vsel %vm1984, %v1971, %v1983
    %vm1987 = vcmask 15360
    %v1988 = vsel %vm1987, %v1985, -inf
    %1989 = vmax.xlane.f32.xlu0 %v1988
    %v1990 = vpop.xlane.xlu0 %1989
    %v1992 = vlaneseq
    %v1993 = vshrl.u32 %v1992, 7
    %v1994 = vsub.s32 0, %v1993
    %v1995 = vrot.slane %v1990, %v1994
    %v1996 = vlaneseq
    %v1997 = vshrl.u32 %v1996, 7
    %v1998 = vsub.s32 1, %v1997
    %v1999 = vrot.slane %v1990, %v1998
    %v2000 = vlaneseq
    %v2001 = vshrl.u32 %v2000, 7
    %v2002 = vsub.s32 2, %v2001
    %v2003 = vrot.slane %v1990, %v2002
    %v2004 = vlaneseq
    %v2005 = vshrl.u32 %v2004, 7
    %v2006 = vsub.s32 3, %v2005
    %v2007 = vrot.slane %v1990, %v2006
    %v2008 = vlaneseq
    %v2009 = vshrl.u32 %v2008, 7
    %v2010 = vsub.s32 4, %v2009
    %v2011 = vrot.slane %v1990, %v2010
    %v2012 = vlaneseq
    %v2013 = vshrl.u32 %v2012, 7
    %v2014 = vsub.s32 5, %v2013
    %v2015 = vrot.slane %v1990, %v2014
    %v2016 = vlaneseq
    %v2017 = vshrl.u32 %v2016, 7
    %v2018 = vsub.s32 6, %v2017
    %v2019 = vrot.slane %v1990, %v2018
    %v2020 = vlaneseq
    %v2021 = vshrl.u32 %v2020, 7
    %v2022 = vsub.s32 7, %v2021
    %v2023 = vrot.slane %v1990, %v2022
    %v2032 = vsub.f32 %v1908, %v1995
    %v2033 = vsub.f32 %v1911, %v1999
    %v2034 = vsub.f32 %v1914, %v2003
    %v2035 = vsub.f32 %v1917, %v2007
    %v2036 = vsub.f32 %v1920, %v2011
    %v2037 = vsub.f32 %v1923, %v2015
    %v2038 = vsub.f32 %v1926, %v2019
    %v2039 = vsub.f32 %v1929, %v2023
    %v2040 = vmul.f32 %v2032, 1.442695
    %v2041 = vpow.pop %v2040
    %v2042 = vmul.f32 %v2033, 1.442695
    %v2043 = vpow.pop %v2042
    %v2044 = vmul.f32 %v2034, 1.442695
    %v2045 = vpow.pop %v2044
    %v2046 = vmul.f32 %v2035, 1.442695
    %v2047 = vpow.pop %v2046
    %v2048 = vmul.f32 %v2036, 1.442695
    %v2049 = vpow.pop %v2048
    %v2050 = vmul.f32 %v2037, 1.442695
    %v2051 = vpow.pop %v2050
    %v2052 = vmul.f32 %v2038, 1.442695
    %v2053 = vpow.pop %v2052
    %v2054 = vmul.f32 %v2039, 1.442695
    %v2055 = vpow.pop %v2054
    %2064 = vset.pattern.permute.xlu0 0
    %2065 = vperm.xlu0 %2064, %v2041
    %v2066 = vpop.permute.xlu0 %2065
    %2067 = vset.pattern.permute.xlu0 0
    %2068 = vperm.xlu0 %2067, %v2043
    %v2069 = vpop.permute.xlu0 %2068
    %2070 = vset.pattern.permute.xlu0 0
    %2071 = vperm.xlu0 %2070, %v2045
    %v2072 = vpop.permute.xlu0 %2071
    %2073 = vset.pattern.permute.xlu0 0
    %2074 = vperm.xlu0 %2073, %v2047
    %v2075 = vpop.permute.xlu0 %2074
    %2076 = vset.pattern.permute.xlu0 0
    %2077 = vperm.xlu0 %2076, %v2049
    %v2078 = vpop.permute.xlu0 %2077
    %2079 = vset.pattern.permute.xlu0 0
    %2080 = vperm.xlu0 %2079, %v2051
    %v2081 = vpop.permute.xlu0 %2080
    %2082 = vset.pattern.permute.xlu0 0
    %2083 = vperm.xlu0 %2082, %v2053
    %v2084 = vpop.permute.xlu0 %2083
    %2085 = vset.pattern.permute.xlu0 0
    %2086 = vperm.xlu0 %2085, %v2055
    %v2087 = vpop.permute.xlu0 %2086
    %v2088 = vlaneseq
    %v2089 = vshrl.u32 %v2088, 7
    %v2090 = vsub.s32 %v1939, %v2089
    %v2091 = vrot.slane %v2066, %v2090
    %v2092 = vlaneseq
    %v2093 = vshrl.u32 %v2092, 7
    %v2094 = vsub.s32 %v1939, %v2093
    %v2095 = vrot.slane %v2069, %v2094
    %v2096 = vlaneseq
    %v2097 = vshrl.u32 %v2096, 7
    %v2098 = vsub.s32 %v1939, %v2097
    %v2099 = vrot.slane %v2072, %v2098
    %v2100 = vlaneseq
    %v2101 = vshrl.u32 %v2100, 7
    %v2102 = vsub.s32 %v1939, %v2101
    %v2103 = vrot.slane %v2075, %v2102
    %v2104 = vlaneseq
    %v2105 = vshrl.u32 %v2104, 7
    %v2106 = vsub.s32 %v1939, %v2105
    %v2107 = vrot.slane %v2078, %v2106
    %v2108 = vlaneseq
    %v2109 = vshrl.u32 %v2108, 7
    %v2110 = vsub.s32 %v1939, %v2109
    %v2111 = vrot.slane %v2081, %v2110
    %v2112 = vlaneseq
    %v2113 = vshrl.u32 %v2112, 7
    %v2114 = vsub.s32 %v1939, %v2113
    %v2115 = vrot.slane %v2084, %v2114
    %v2116 = vlaneseq
    %v2117 = vshrl.u32 %v2116, 7
    %v2118 = vsub.s32 %v1939, %v2117
    %v2119 = vrot.slane %v2087, %v2118
    %v2120 = vsel %vm1972, %v2095, %v2091
    %v2121 = vsel %vm1974, %v2099, %v2120
    %v2122 = vsel %vm1976, %v2103, %v2121
    %v2123 = vsel %vm1978, %v2107, %v2122
    %v2124 = vsel %vm1980, %v2111, %v2123
    %v2125 = vsel %vm1982, %v2115, %v2124
    %v2126 = vsel %vm1984, %v2119, %v2125
    %v2128 = vsel %vm1987, %v2126, 0.0
    %2129 = vadd.xlane.f32.xlu0 %v2128
    %v2130 = vpop.xlane.xlu0 %2129
    %v2132 = vlaneseq
    %v2133 = vshrl.u32 %v2132, 7
    %v2134 = vsub.s32 0, %v2133
    %v2135 = vrot.slane %v2130, %v2134
    %v2136 = vlaneseq
    %v2137 = vshrl.u32 %v2136, 7
    %v2138 = vsub.s32 1, %v2137
    %v2139 = vrot.slane %v2130, %v2138
    %v2140 = vlaneseq
    %v2141 = vshrl.u32 %v2140, 7
    %v2142 = vsub.s32 2, %v2141
    %v2143 = vrot.slane %v2130, %v2142
    %v2144 = vlaneseq
    %v2145 = vshrl.u32 %v2144, 7
    %v2146 = vsub.s32 3, %v2145
    %v2147 = vrot.slane %v2130, %v2146
    %v2148 = vlaneseq
    %v2149 = vshrl.u32 %v2148, 7
    %v2150 = vsub.s32 4, %v2149
    %v2151 = vrot.slane %v2130, %v2150
    %v2152 = vlaneseq
    %v2153 = vshrl.u32 %v2152, 7
    %v2154 = vsub.s32 5, %v2153
    %v2155 = vrot.slane %v2130, %v2154
    %v2156 = vlaneseq
    %v2157 = vshrl.u32 %v2156, 7
    %v2158 = vsub.s32 6, %v2157
    %v2159 = vrot.slane %v2130, %v2158
    %v2160 = vlaneseq
    %v2161 = vshrl.u32 %v2160, 7
    %v2162 = vsub.s32 7, %v2161
    %v2163 = vrot.slane %v2130, %v2162
    %v2172 = vrcp.pop %v2135
    %v2173 = vmul.f32 %v2041, %v2172
    %v2174 = vrcp.pop %v2139
    %v2175 = vmul.f32 %v2043, %v2174
    %v2176 = vrcp.pop %v2143
    %v2177 = vmul.f32 %v2045, %v2176
    %v2178 = vrcp.pop %v2147
    %v2179 = vmul.f32 %v2047, %v2178
    %v2180 = vrcp.pop %v2151
    %v2181 = vmul.f32 %v2049, %v2180
    %v2182 = vrcp.pop %v2155
    %v2183 = vmul.f32 %v2051, %v2182
    %v2184 = vrcp.pop %v2159
    %v2185 = vmul.f32 %v2053, %v2184
    %v2186 = vrcp.pop %v2163
    %v2187 = vmul.f32 %v2055, %v2186
    %2189 = vset.pattern.permute.xlu0 0
    %2190 = vperm.xlu0 %2189, %v2173
    %v2191 = vpop.permute.xlu0 %2190
    %2194 = vset.pattern.permute.xlu0 0
    %2195 = vperm.xlu0 %2194, %v2175
    %v2196 = vpop.permute.xlu0 %2195
    %2199 = vset.pattern.permute.xlu0 0
    %2200 = vperm.xlu0 %2199, %v2177
    %v2201 = vpop.permute.xlu0 %2200
    %2204 = vset.pattern.permute.xlu0 0
    %2205 = vperm.xlu0 %2204, %v2179
    %v2206 = vpop.permute.xlu0 %2205
    %2209 = vset.pattern.permute.xlu0 0
    %2210 = vperm.xlu0 %2209, %v2181
    %v2211 = vpop.permute.xlu0 %2210
    %2214 = vset.pattern.permute.xlu0 0
    %2215 = vperm.xlu0 %2214, %v2183
    %v2216 = vpop.permute.xlu0 %2215
    %2219 = vset.pattern.permute.xlu0 0
    %2220 = vperm.xlu0 %2219, %v2185
    %v2221 = vpop.permute.xlu0 %2220
    %2224 = vset.pattern.permute.xlu0 0
    %2225 = vperm.xlu0 %2224, %v2187
    %v2226 = vpop.permute.xlu0 %2225
    %v2228 = vmul.f32 %v2191, %v1689
    %v2229 = vmul.f32 %v2196, %v1690
    %v2230 = vmul.f32 %v2201, %v1691
    %v2231 = vmul.f32 %v2206, %v1692
    %v2232 = vmul.f32 %v2211, %v1693
    %v2233 = vmul.f32 %v2216, %v1694
    %v2234 = vmul.f32 %v2221, %v1695
    %v2235 = vmul.f32 %v2226, %v1707
    %v2236 = vsel %vm1905, %v2228, 0.0
    %v2237 = vrot.slane %v2236, 4
    %v2238 = vadd.f32 %v2236, %v2237
    %v2239 = vrot.slane %v2238, 2
    %v2240 = vadd.f32 %v2238, %v2239
    %v2241 = vrot.slane %v2240, 1
    %v2242 = vadd.f32 %v2240, %v2241
    %v2243 = vsel %vm1905, %v2229, 0.0
    %v2244 = vrot.slane %v2243, 4
    %v2245 = vadd.f32 %v2243, %v2244
    %v2246 = vrot.slane %v2245, 2
    %v2247 = vadd.f32 %v2245, %v2246
    %v2248 = vrot.slane %v2247, 1
    %v2249 = vadd.f32 %v2247, %v2248
    %v2250 = vsel %vm1905, %v2230, 0.0
    %v2251 = vrot.slane %v2250, 4
    %v2252 = vadd.f32 %v2250, %v2251
    %v2253 = vrot.slane %v2252, 2
    %v2254 = vadd.f32 %v2252, %v2253
    %v2255 = vrot.slane %v2254, 1
    %v2256 = vadd.f32 %v2254, %v2255
    %v2257 = vsel %vm1905, %v2231, 0.0
    %v2258 = vrot.slane %v2257, 4
    %v2259 = vadd.f32 %v2257, %v2258
    %v2260 = vrot.slane %v2259, 2
    %v2261 = vadd.f32 %v2259, %v2260
    %v2262 = vrot.slane %v2261, 1
    %v2263 = vadd.f32 %v2261, %v2262
    %v2264 = vsel %vm1905, %v2232, 0.0
    %v2265 = vrot.slane %v2264, 4
    %v2266 = vadd.f32 %v2264, %v2265
    %v2267 = vrot.slane %v2266, 2
    %v2268 = vadd.f32 %v2266, %v2267
    %v2269 = vrot.slane %v2268, 1
    %v2270 = vadd.f32 %v2268, %v2269
    %v2271 = vsel %vm1905, %v2233, 0.0
    %v2272 = vrot.slane %v2271, 4
    %v2273 = vadd.f32 %v2271, %v2272
    %v2274 = vrot.slane %v2273, 2
    %v2275 = vadd.f32 %v2273, %v2274
    %v2276 = vrot.slane %v2275, 1
    %v2277 = vadd.f32 %v2275, %v2276
    %v2278 = vsel %vm1905, %v2234, 0.0
    %v2279 = vrot.slane %v2278, 4
    %v2280 = vadd.f32 %v2278, %v2279
    %v2281 = vrot.slane %v2280, 2
    %v2282 = vadd.f32 %v2280, %v2281
    %v2283 = vrot.slane %v2282, 1
    %v2284 = vadd.f32 %v2282, %v2283
    %v2285 = vsel %vm1905, %v2235, 0.0
    %v2286 = vrot.slane %v2285, 4
    %v2287 = vadd.f32 %v2285, %v2286
    %v2288 = vrot.slane %v2287, 2
    %v2289 = vadd.f32 %v2287, %v2288
    %v2290 = vrot.slane %v2289, 1
    %v2291 = vadd.f32 %v2289, %v2290
    %v2300 = vsel %vm1972, %v2249, %v2242
    %v2301 = vsel %vm1974, %v2256, %v2300
    %v2302 = vsel %vm1976, %v2263, %v2301
    %v2303 = vsel %vm1978, %v2270, %v2302
    %v2304 = vsel %vm1980, %v2277, %v2303
    %v2305 = vsel %vm1982, %v2284, %v2304
    %v2306 = vsel %vm1984, %v2291, %v2305
    %2308 = vst.msk [vmem:[#allocation11] sm:$0xff] %vm324, %v2306
    // Predicated region
    $region54: #{sent2vec_forward.1} parent=1 // pred_check
      _
    $region55: #{sent2vec_forward.1} parent=1 // pred_check_branch
      %2310 = sbr.rel (0) target = $region57
    $region56: #{sent2vec_forward.1} parent=1 // pred_region
      %s2312 = ssub.s32 128, 128
      %2313 = vsyncadd [#allocation4], %s2312
      %s2315 = sshll.u32 [#allocation11], 4
      %s2316 = int_to_ptr.vmem [resolvable:$true] %s2315
      %2318 = dma.vmem_to_hbm [thread:$0]  %s2316, 128, %s8, [#allocation4]
    $region57: #{sent2vec_forward.1} parent=1 // pred_fallthru
      _
    // Predicated region
    $region58: #{sent2vec_forward.1} parent=1 // pred_check
      _
    $region59: #{sent2vec_forward.1} parent=1 // pred_check_branch
      %2320 = sbr.rel (0) target = $region61
    $region60: #{sent2vec_forward.1} parent=1 // pred_region
      %2321 = dma.done [#allocation4], 128
    $region61: #{sent2vec_forward.1} parent=1 // pred_fallthru
      _
    %2322 = vsyncpa [#allocation3], 1
    %2323 = vsyncpa [#allocation6], 1
    %2324 = vsyncpa [#allocation9], 1
    %2325 = vsyncpa [#allocation4], 1

</llo_original>
